<compile_context>
chip_gen: v5e
topology: v5e:2x2
jax: 0.10.0
libtpu: 0.0.40
codegen_flags: <defaults>
</compile_context>

<pallas_src>
import jax
import jax.numpy as jnp
from jax import lax
from jax.experimental import pallas as pl
from jax.experimental.pallas import tpu as pltpu


def basic_block_kernel(xc_ref, xid_ref, w1_ref, b1_ref, w2_ref, b2_ref, o_ref):
    # xc_ref : (TM, 9*Cin) bf16   im2col slab, column = (ky*3+kx)*Cin + cin
    # xid_ref: (TM, C)     f32    residual identity (original input pixels)
    # w1_ref : (9*Cin, C)  bf16   3x3 conv weights with BN1 scale folded in
    # b1_ref : (1, C)      f32    BN1 shift
    # w2_ref : (C, C)      bf16   1x1 conv weights with BN2 scale folded in
    # b2_ref : (1, C)      f32    BN2 shift
    # o_ref  : (TM, C)     f32
    h = jnp.dot(xc_ref[...], w1_ref[...], preferred_element_type=jnp.float32)
    h = jnp.maximum(h + b1_ref[...], 0.0)                       # BN1 shift + ReLU
    y = jnp.dot(h.astype(w2_ref.dtype), w2_ref[...],
                preferred_element_type=jnp.float32)
    y = y + b2_ref[...] + xid_ref[...]                          # BN2 shift + residual
    o_ref[...] = jnp.maximum(y, 0.0)                            # final ReLU


def _pick_tile(m: int) -> int:
    for t in (256, 512, 128, 64, 32, 16, 8):
        if m % t == 0:
            return t
    return m


@jax.jit
def basic_block_pallas(x_nchw, w1, bn1, w2, bn2):
    """x_nchw: (N, C, H, W) f32.  w1: (Cout, Cin, 3, 3), w2: (Cout, Cout, 1, 1).
    bn1 / bn2: (gamma, beta, running_mean, running_var) tuples (eval mode)."""
    N, Cin, H, W = x_nchw.shape
    Cout = w1.shape[0]
    # Default BasicBlock path only: Stride=1, Downsample=None -> InPlanes==Planes.
    assert Cin == Cout and w1.shape[1] == Cin and w2.shape[:2] == (Cout, Cout)
    eps = 1e-5

    def fold(bn):
        gamma, beta, mean, var = bn
        scale = gamma / jnp.sqrt(var + eps)
        return scale, beta - mean * scale

    s1, b1 = fold(bn1)
    s2, b2 = fold(bn2)

    # Fold BN scales into conv weights (per output channel), cast to bf16.
    # (Cout, Cin, 3, 3) -> (3, 3, Cin, Cout) -> (9*Cin, Cout)
    w1_mat = jnp.transpose(w1, (2, 3, 1, 0)).reshape(9 * Cin, Cout) * s1[None, :]
    w2_mat = w2.reshape(Cout, Cin).T * s2[None, :]
    w1_bf = w1_mat.astype(jnp.bfloat16)
    w2_bf = w2_mat.astype(jnp.bfloat16)
    b1 = b1.reshape(1, Cout).astype(jnp.float32)
    b2 = b2.reshape(1, Cout).astype(jnp.float32)

    # NCHW -> NHWC (channels on the lane axis), pad H/W by 1, im2col in the wrapper.
    x_nhwc = jnp.transpose(x_nchw, (0, 2, 3, 1))
    xp = jnp.pad(x_nhwc, ((0, 0), (1, 1), (1, 1), (0, 0)))
    taps = [xp[:, ky:ky + H, kx:kx + W, :] for ky in range(3) for kx in range(3)]
    M = N * H * W
    x_cols = jnp.stack(taps, axis=3).reshape(M, 9 * Cin).astype(jnp.bfloat16)
    x_id = x_nhwc.reshape(M, Cin)                      # residual stays f32

    tm = _pick_tile(M)
    grid = (M // tm,)

    flops = 2 * M * (9 * Cin) * Cout + 2 * M * Cout * Cout
    bytes_accessed = (x_cols.size * 2 + x_id.size * 4 + w1_bf.size * 2 +
                      w2_bf.size * 2 + b1.size * 4 + b2.size * 4 + M * Cout * 4)

    out_flat = pl.pallas_call(
        basic_block_kernel,
        out_shape=jax.ShapeDtypeStruct((M, Cout), jnp.float32),
        grid=grid,
        in_specs=[
            pl.BlockSpec((tm, 9 * Cin), lambda i: (i, 0)),     # im2col slab (tiled)
            pl.BlockSpec((tm, Cin), lambda i: (i, 0)),         # identity (tiled)
            pl.BlockSpec((9 * Cin, Cout), lambda i: (0, 0)),   # conv1 weights (resident)
            pl.BlockSpec((1, Cout), lambda i: (0, 0)),         # BN1 shift
            pl.BlockSpec((Cout, Cout), lambda i: (0, 0)),      # conv2 weights (resident)
            pl.BlockSpec((1, Cout), lambda i: (0, 0)),         # BN2 shift
        ],
        out_specs=pl.BlockSpec((tm, Cout), lambda i: (i, 0)),
        compiler_params=pltpu.CompilerParams(
            dimension_semantics=("parallel",),
            vmem_limit_bytes=32 * 1024 * 1024,
        ),
        cost_estimate=pl.CostEstimate(
            flops=flops, transcendentals=0, bytes_accessed=bytes_accessed),
    )(x_cols, x_id, w1_bf, b1, w2_bf, b2)

    # (M, Cout) -> (N, H, W, Cout) -> NCHW
    return jnp.transpose(out_flat.reshape(N, H, W, Cout), (0, 3, 1, 2))


def basic_block_reference(x_nchw, w1, bn1, w2, bn2):
    """Pure-JAX f32 reference (NCHW, same semantics as the PyTorch module)."""
    eps = 1e-5

    def bn(x, p):
        gamma, beta, mean, var = p
        sc = (gamma / jnp.sqrt(var + eps)).reshape(1, -1, 1, 1)
        sh = (beta - mean * gamma / jnp.sqrt(var + eps)).reshape(1, -1, 1, 1)
        return x * sc + sh

    y = lax.conv_general_dilated(x_nchw, w1, (1, 1), ((1, 1), (1, 1)),
                                 dimension_numbers=("NCHW", "OIHW", "NCHW"))
    y = jnp.maximum(bn(y, bn1), 0.0)
    y = lax.conv_general_dilated(y, w2, (1, 1), ((0, 0), (0, 0)),
                                 dimension_numbers=("NCHW", "OIHW", "NCHW"))
    y = bn(y, bn2)
    return jnp.maximum(y + x_nchw, 0.0)


if __name__ == "__main__":
    key = jax.random.PRNGKey(0)
    ks = jax.random.split(key, 11)

    # BasicBlock default path: InPlanes == Planes, Stride=1, no Downsample.
    # C=128 is a real ResNet BasicBlock width and keeps the output lane-dense.
    N, C, H, W = 2, 128, 16, 16
    x = jax.random.normal(ks[0], (N, C, H, W), jnp.float32)

    w1 = jax.random.normal(ks[1], (C, C, 3, 3), jnp.float32) * 0.1
    w2 = jax.random.normal(ks[2], (C, C, 1, 1), jnp.float32) * 0.1

    bn1 = (1.0 + 0.1 * jax.random.normal(ks[3], (C,), jnp.float32),   # gamma
           0.1 * jax.random.normal(ks[4], (C,), jnp.float32),         # beta
           0.1 * jax.random.normal(ks[5], (C,), jnp.float32),         # running mean
           1.0 + 0.1 * jax.random.uniform(ks[6], (C,), jnp.float32))  # running var
    bn2 = (1.0 + 0.1 * jax.random.normal(ks[7], (C,), jnp.float32),
           0.1 * jax.random.normal(ks[8], (C,), jnp.float32),
           0.1 * jax.random.normal(ks[9], (C,), jnp.float32),
           1.0 + 0.1 * jax.random.uniform(ks[10], (C,), jnp.float32))

    out = jax.block_until_ready(basic_block_pallas(x, w1, bn1, w2, bn2))
    ref = jax.block_until_ready(basic_block_reference(x, w1, bn1, w2, bn2))

    assert out.shape == (N, C, H, W)
    # bf16 matmul operands (f32 accumulation / residual) -> loosened tolerance.
    assert jnp.allclose(out, ref, atol=1e-1, rtol=5e-2), "mismatch vs reference"
    print("KERNEL_OK")
</pallas_src>

<mosaic_0001>
module attributes {stable_mosaic.version = 11 : i64} {
  func.func @basic_block_kernel(%arg0: i32, %arg1: memref<256x1152xbf16, #tpu.memory_space<vmem>>, %arg2: memref<256x128xf32, #tpu.memory_space<vmem>>, %arg3: memref<1152x128xbf16, #tpu.memory_space<vmem>>, %arg4: memref<1x128xf32, #tpu.memory_space<vmem>>, %arg5: memref<128x128xbf16, #tpu.memory_space<vmem>>, %arg6: memref<1x128xf32, #tpu.memory_space<vmem>>, %arg7: memref<256x128xf32, #tpu.memory_space<vmem>>) attributes {dimension_semantics = [#tpu.dimension_semantics<parallel>], iteration_bounds = array<i64: 2>, scalar_prefetch = 0 : i64, scratch_operands = 0 : i64, tpu.core_type = #tpu.core_type<tc>, window_params = [{transform_indices = @transform_0, window_bounds = array<i64: 256, 1152>}, {transform_indices = @transform_1, window_bounds = array<i64: 256, 128>}, {pipeline_mode = #tpu.pipeline_mode<synchronous>, transform_indices = @transform_2, window_bounds = array<i64: 1152, 128>}, {pipeline_mode = #tpu.pipeline_mode<synchronous>, transform_indices = @transform_3, window_bounds = array<i64: 1, 128>}, {pipeline_mode = #tpu.pipeline_mode<synchronous>, transform_indices = @transform_4, window_bounds = array<i64: 128, 128>}, {pipeline_mode = #tpu.pipeline_mode<synchronous>, transform_indices = @transform_5, window_bounds = array<i64: 1, 128>}, {transform_indices = @transform_6, window_bounds = array<i64: 256, 128>}]} {
    %c0 = arith.constant 0 : index
    %c0_0 = arith.constant 0 : index
    %0 = vector.load %arg1[%c0, %c0_0] : memref<256x1152xbf16, #tpu.memory_space<vmem>>, vector<256x1152xbf16>
    %c0_1 = arith.constant 0 : index
    %c0_2 = arith.constant 0 : index
    %1 = vector.load %arg3[%c0_1, %c0_2] : memref<1152x128xbf16, #tpu.memory_space<vmem>>, vector<1152x128xbf16>
    %cst = arith.constant dense<0.000000e+00> : vector<256x128xf32>
    %2 = tpu.matmul %0, %1, %cst {dimension_numbers = #tpu.dot_dimension_numbers<[1], [0], [0], [1], [0, 0, 1, 1], [], []>} : vector<256x1152xbf16>, vector<1152x128xbf16>, vector<256x128xf32> -> vector<256x128xf32>
    %c0_3 = arith.constant 0 : index
    %c0_4 = arith.constant 0 : index
    %3 = vector.load %arg4[%c0_3, %c0_4] : memref<1x128xf32, #tpu.memory_space<vmem>>, vector<1x128xf32>
    %4 = vector.broadcast %3 : vector<1x128xf32> to vector<256x128xf32>
    %5 = arith.addf %2, %4 : vector<256x128xf32>
    %cst_5 = arith.constant 0.000000e+00 : f32
    %6 = vector.broadcast %cst_5 : f32 to vector<256x128xf32>
    %7 = arith.maximumf %5, %6 : vector<256x128xf32>
    %8 = arith.truncf %7 : vector<256x128xf32> to vector<256x128xbf16>
    %c0_6 = arith.constant 0 : index
    %c0_7 = arith.constant 0 : index
    %9 = vector.load %arg5[%c0_6, %c0_7] : memref<128x128xbf16, #tpu.memory_space<vmem>>, vector<128x128xbf16>
    %cst_8 = arith.constant dense<0.000000e+00> : vector<256x128xf32>
    %10 = tpu.matmul %8, %9, %cst_8 {dimension_numbers = #tpu.dot_dimension_numbers<[1], [0], [0], [1], [0, 0, 1, 1], [], []>} : vector<256x128xbf16>, vector<128x128xbf16>, vector<256x128xf32> -> vector<256x128xf32>
    %c0_9 = arith.constant 0 : index
    %c0_10 = arith.constant 0 : index
    %11 = vector.load %arg6[%c0_9, %c0_10] : memref<1x128xf32, #tpu.memory_space<vmem>>, vector<1x128xf32>
    %12 = vector.broadcast %11 : vector<1x128xf32> to vector<256x128xf32>
    %13 = arith.addf %10, %12 : vector<256x128xf32>
    %c0_11 = arith.constant 0 : index
    %c0_12 = arith.constant 0 : index
    %14 = vector.load %arg2[%c0_11, %c0_12] : memref<256x128xf32, #tpu.memory_space<vmem>>, vector<256x128xf32>
    %15 = arith.addf %13, %14 : vector<256x128xf32>
    %cst_13 = arith.constant 0.000000e+00 : f32
    %16 = vector.broadcast %cst_13 : f32 to vector<256x128xf32>
    %17 = arith.maximumf %15, %16 : vector<256x128xf32>
    %c0_14 = arith.constant 0 : index
    %c0_15 = arith.constant 0 : index
    %18 = vector.load %arg7[%c0_14, %c0_15] : memref<256x128xf32, #tpu.memory_space<vmem>>, vector<256x128xf32>
    tpu.vector_store %arg7[%c0_14, %c0_15], %17 {strides = array<i32>} : memref<256x128xf32, #tpu.memory_space<vmem>>, vector<256x128xf32>,
    return
  }
  func.func @transform_0(%arg0: i32) -> (i32, i32) {
    %c0_i32 = arith.constant 0 : i32
    %c0_i32_0 = arith.constant 0 : i32
    return %arg0, %c0_i32 : i32, i32
  }
  func.func @transform_1(%arg0: i32) -> (i32, i32) {
    %c0_i32 = arith.constant 0 : i32
    %c0_i32_0 = arith.constant 0 : i32
    return %arg0, %c0_i32 : i32, i32
  }
  func.func @transform_2(%arg0: i32) -> (i32, i32) {
    %c0_i32 = arith.constant 0 : i32
    %c0_i32_0 = arith.constant 0 : i32
    %c0_i32_1 = arith.constant 0 : i32
    return %c0_i32, %c0_i32_0 : i32, i32
  }
  func.func @transform_3(%arg0: i32) -> (i32, i32) {
    %c0_i32 = arith.constant 0 : i32
    %c0_i32_0 = arith.constant 0 : i32
    %c0_i32_1 = arith.constant 0 : i32
    return %c0_i32, %c0_i32_0 : i32, i32
  }
  func.func @transform_4(%arg0: i32) -> (i32, i32) {
    %c0_i32 = arith.constant 0 : i32
    %c0_i32_0 = arith.constant 0 : i32
    %c0_i32_1 = arith.constant 0 : i32
    return %c0_i32, %c0_i32_0 : i32, i32
  }
  func.func @transform_5(%arg0: i32) -> (i32, i32) {
    %c0_i32 = arith.constant 0 : i32
    %c0_i32_0 = arith.constant 0 : i32
    %c0_i32_1 = arith.constant 0 : i32
    return %c0_i32, %c0_i32_0 : i32, i32
  }
  func.func @transform_6(%arg0: i32) -> (i32, i32) {
    %c0_i32 = arith.constant 0 : i32
    %c0_i32_0 = arith.constant 0 : i32
    return %arg0, %c0_i32 : i32, i32
  }
}

</mosaic_0001>

<llo_original>
// kernel: basic_block_pallas.1
$region0: #{basic_block_pallas.1}
  #allocation0 [shape = 'u32[]', space=smem, size = 0x4, offset = 0x4, fixed_abs, tag = 'smem constant byte address 0x4 - core index']
  #allocation1 [shape = 'u32[72,128]{1,0:T(1,128)}', space=vmem, size = 0x9000, scoped, tag = 'internal scratch']
  %s0 = inlined_call_operand.vmem [shape: bf16[512,1152], index: 0, kind: input, shape index: {}]
  %s1 = inlined_call_operand.vmem [shape: f32[512,128], index: 1, kind: input, shape index: {}]
  %s2 = inlined_call_operand.vmem [shape: bf16[1152,128], index: 2, kind: input, shape index: {}]
  %s3 = inlined_call_operand.vmem [shape: f32[1,128], index: 3, kind: input, shape index: {}]
  %s4 = inlined_call_operand.vmem [shape: bf16[128,128], index: 4, kind: input, shape index: {}]
  %s5 = inlined_call_operand.vmem [shape: f32[1,128], index: 5, kind: input, shape index: {}]
  %s6 = inlined_call_operand.hbm [shape: f32[512,128], index: 6, kind: output, shape index: {}]
  %s7 = sld [smem:[#allocation0]]
  $region57: #{basic_block_pallas.1} parent=0
    _
  %s9 = ssub.s32 1, %s7
  %s10 = scalar_select 0, %s9, %s7
  $region1: #{basic_block_pallas.1} parent=0
    #allocation2 [shape = 'u8[262144]{0}', space=vmem, size = 0x40000, scoped, tag = 'output window, operand 0']
    #allocation3 [shape = 's32[2]{0}', space=sflag, size = 0x8, scoped, tag = 'scoped memory for basic_block_pallas.1']
    %11 = vsyncpa [#allocation3], 0
    %s12 = scalar_lea.sflag [#allocation3], 1
    %13 = vsyncpa %s12, 0
    loop: start=0, step=1, limit=4
    $region2: #{basic_block_pallas.1} parent=1 // loop_pre_header
      _
    $region3: #{basic_block_pallas.1} parent=1 // loop_header
      %s15 = sphi 0, %s19
      %p16 = scmp.ge.s32.totalorder %s15, 4
      %s25 = sphi 0, %s27
      %s28 = sphi 0, %s25
      %s29 = sphi 0, %s28
      %s45 = sphi 0, %s29
      %s51 = sphi 0, %s53
      %s54 = sphi 0, %s51
      %s55 = sphi 0, %s54
      %s71 = sphi 0, %s55
      %s75 = sphi 0, %s75
      %s77 = sphi 0, %s75
      %s78 = sphi 0, %s77
      %s92 = sphi 0, %s78
      %s96 = sphi 0, %s96
      %s98 = sphi 0, %s96
      %s99 = sphi 0, %s98
      %s113 = sphi 0, %s99
      %s117 = sphi 0, %s117
      %s119 = sphi 0, %s117
      %s120 = sphi 0, %s119
      %s134 = sphi 0, %s120
      %s138 = sphi 0, %s138
      %s140 = sphi 0, %s138
      %s141 = sphi 0, %s140
      %s155 = sphi 0, %s141
      %s161 = sphi 0, %s163
      %s164 = sphi 0, %s161
      %s165 = sphi 0, %s164
      %s181 = sphi 0, %s165
    $region4: #{basic_block_pallas.1} parent=1 // loop_header_branch
      %18 = sbr.rel (%p16) target = $region8
    $region5: #{basic_block_pallas.1} parent=1 // loop_body
      %s20 = ssub.s32 %s15, 1
      %s21 = ssub.s32 %s15, 2
      %s22 = sadd.s32 %s15, 1
      %s23 = ssub.s32 %s15, %s22
      %p24 = scmp.eq.s32.totalorder %s23, 0
      %s26 = sadd.s32 %s25, 1
      %s27 = scalar_select %p24, %s25, %s26
      %p30 = pneg %p24
      %p31 = scmp.eq.s32.totalorder %s15, 1
      %p32 = por %p30, %p31
      %p33 = scmp.ne.s32.totalorder %s25, %s28
      %p34 = scmp.eq.s32.totalorder %s15, 0
      %p35 = por %p33, %p34
      %p36 = scmp.ne.s32.totalorder %s25, %s28
      %p37 = scmp.eq.s32.totalorder %s20, 1
      %p38 = por %p36, %p37
      %p39 = scmp.ne.s32.totalorder %s28, %s29
      %p40 = scmp.eq.s32.totalorder %s20, 0
      %p41 = por %p39, %p40
      %p42 = scmp.ne.s32.totalorder %s28, %s29
      %p43 = scmp.eq.s32.totalorder %s21, 1
      %p44 = por %p42, %p43
      %p46 = scmp.ne.s32.totalorder %s29, %s45
      %p47 = scmp.eq.s32.totalorder %s21, 0
      %p48 = por %p46, %p47
      %s49 = ssub.s32 %s15, %s22
      %p50 = scmp.eq.s32.totalorder %s49, 0
      %s52 = sadd.s32 %s51, 1
      %s53 = scalar_select %p50, %s51, %s52
      %p56 = pneg %p50
      %p57 = scmp.eq.s32.totalorder %s15, 1
      %p58 = por %p56, %p57
      %p59 = scmp.ne.s32.totalorder %s51, %s54
      %p60 = scmp.eq.s32.totalorder %s15, 0
      %p61 = por %p59, %p60
      %p62 = scmp.ne.s32.totalorder %s51, %s54
      %p63 = scmp.eq.s32.totalorder %s20, 1
      %p64 = por %p62, %p63
      %p65 = scmp.ne.s32.totalorder %s54, %s55
      %p66 = scmp.eq.s32.totalorder %s20, 0
      %p67 = por %p65, %p66
      %p68 = scmp.ne.s32.totalorder %s54, %s55
      %p69 = scmp.eq.s32.totalorder %s21, 1
      %p70 = por %p68, %p69
      %p72 = scmp.ne.s32.totalorder %s55, %s71
      %p73 = scmp.eq.s32.totalorder %s21, 0
      %p74 = por %p72, %p73
      %s76 = sadd.s32 %s75, 1
      %p79 = scmp.eq.s32.totalorder %s15, 1
      %p80 = scmp.ne.s32.totalorder %s75, %s77
      %p81 = scmp.eq.s32.totalorder %s15, 0
      %p82 = por %p80, %p81
      %p83 = scmp.ne.s32.totalorder %s75, %s77
      %p84 = scmp.eq.s32.totalorder %s20, 1
      %p85 = por %p83, %p84
      %p86 = scmp.ne.s32.totalorder %s77, %s78
      %p87 = scmp.eq.s32.totalorder %s20, 0
      %p88 = por %p86, %p87
      %p89 = scmp.ne.s32.totalorder %s77, %s78
      %p90 = scmp.eq.s32.totalorder %s21, 1
      %p91 = por %p89, %p90
      %p93 = scmp.ne.s32.totalorder %s78, %s92
      %p94 = scmp.eq.s32.totalorder %s21, 0
      %p95 = por %p93, %p94
      %s97 = sadd.s32 %s96, 1
      %p100 = scmp.eq.s32.totalorder %s15, 1
      %p101 = scmp.ne.s32.totalorder %s96, %s98
      %p102 = scmp.eq.s32.totalorder %s15, 0
      %p103 = por %p101, %p102
      %p104 = scmp.ne.s32.totalorder %s96, %s98
      %p105 = scmp.eq.s32.totalorder %s20, 1
      %p106 = por %p104, %p105
      %p107 = scmp.ne.s32.totalorder %s98, %s99
      %p108 = scmp.eq.s32.totalorder %s20, 0
      %p109 = por %p107, %p108
      %p110 = scmp.ne.s32.totalorder %s98, %s99
      %p111 = scmp.eq.s32.totalorder %s21, 1
      %p112 = por %p110, %p111
      %p114 = scmp.ne.s32.totalorder %s99, %s113
      %p115 = scmp.eq.s32.totalorder %s21, 0
      %p116 = por %p114, %p115
      %s118 = sadd.s32 %s117, 1
      %p121 = scmp.eq.s32.totalorder %s15, 1
      %p122 = scmp.ne.s32.totalorder %s117, %s119
      %p123 = scmp.eq.s32.totalorder %s15, 0
      %p124 = por %p122, %p123
      %p125 = scmp.ne.s32.totalorder %s117, %s119
      %p126 = scmp.eq.s32.totalorder %s20, 1
      %p127 = por %p125, %p126
      %p128 = scmp.ne.s32.totalorder %s119, %s120
      %p129 = scmp.eq.s32.totalorder %s20, 0
      %p130 = por %p128, %p129
      %p131 = scmp.ne.s32.totalorder %s119, %s120
      %p132 = scmp.eq.s32.totalorder %s21, 1
      %p133 = por %p131, %p132
      %p135 = scmp.ne.s32.totalorder %s120, %s134
      %p136 = scmp.eq.s32.totalorder %s21, 0
      %p137 = por %p135, %p136
      %s139 = sadd.s32 %s138, 1
      %p142 = scmp.eq.s32.totalorder %s15, 1
      %p143 = scmp.ne.s32.totalorder %s138, %s140
      %p144 = scmp.eq.s32.totalorder %s15, 0
      %p145 = por %p143, %p144
      %p146 = scmp.ne.s32.totalorder %s138, %s140
      %p147 = scmp.eq.s32.totalorder %s20, 1
      %p148 = por %p146, %p147
      %p149 = scmp.ne.s32.totalorder %s140, %s141
      %p150 = scmp.eq.s32.totalorder %s20, 0
      %p151 = por %p149, %p150
      %p152 = scmp.ne.s32.totalorder %s140, %s141
      %p153 = scmp.eq.s32.totalorder %s21, 1
      %p154 = por %p152, %p153
      %p156 = scmp.ne.s32.totalorder %s141, %s155
      %p157 = scmp.eq.s32.totalorder %s21, 0
      %p158 = por %p156, %p157
      %s159 = ssub.s32 %s15, %s22
      %p160 = scmp.eq.s32.totalorder %s159, 0
      %s162 = sadd.s32 %s161, 1
      %s163 = scalar_select %p160, %s161, %s162
      %p166 = pneg %p160
      %p167 = scmp.eq.s32.totalorder %s15, 1
      %p168 = por %p166, %p167
      %p169 = scmp.ne.s32.totalorder %s161, %s164
      %p170 = scmp.eq.s32.totalorder %s15, 0
      %p171 = por %p169, %p170
      %p172 = scmp.ne.s32.totalorder %s161, %s164
      %p173 = scmp.eq.s32.totalorder %s20, 1
      %p174 = por %p172, %p173
      %p175 = scmp.ne.s32.totalorder %s164, %s165
      %p176 = scmp.eq.s32.totalorder %s20, 0
      %p177 = por %p175, %p176
      %p178 = scmp.ne.s32.totalorder %s164, %s165
      %p179 = scmp.eq.s32.totalorder %s21, 1
      %p180 = por %p178, %p179
      %p182 = scmp.ne.s32.totalorder %s165, %s181
      %p183 = scmp.eq.s32.totalorder %s21, 0
      %p184 = por %p182, %p183
      %p185 = scmp.le.s32.totalorder 1, %s15
      %p186 = scmp.lt.s32.totalorder %s15, 3
      %p187 = pnand %p185, %p186
      %p188 = pneg %p187
      // Predicated region
      $region9: #{basic_block_pallas.1} parent=5 // pred_check
        _
      $region10: #{basic_block_pallas.1} parent=5 // pred_check_branch
        %190 = sbr.rel (%p187) target = $region12
      $region11: #{basic_block_pallas.1} parent=5 // pred_region
        %s191 = ssub.s32 %s15, 1
        // Predicated region
        $region13: #{basic_block_pallas.1} parent=11 // pred_check
          %p192 = pneg %p88
        $region14: #{basic_block_pallas.1} parent=11 // pred_check_branch
          %194 = sbr.rel (%p192) target = $region16
        $region15: #{basic_block_pallas.1} parent=11 // pred_region
          _
        $region16: #{basic_block_pallas.1} parent=11 // pred_fallthru
          _
        // Predicated region
        $region17: #{basic_block_pallas.1} parent=11 // pred_check
          %p195 = pneg %p109
        $region18: #{basic_block_pallas.1} parent=11 // pred_check_branch
          %197 = sbr.rel (%p195) target = $region20
        $region19: #{basic_block_pallas.1} parent=11 // pred_region
          _
        $region20: #{basic_block_pallas.1} parent=11 // pred_fallthru
          _
        // Predicated region
        $region21: #{basic_block_pallas.1} parent=11 // pred_check
          %p198 = pneg %p130
        $region22: #{basic_block_pallas.1} parent=11 // pred_check_branch
          %200 = sbr.rel (%p198) target = $region24
        $region23: #{basic_block_pallas.1} parent=11 // pred_region
          _
        $region24: #{basic_block_pallas.1} parent=11 // pred_fallthru
          _
        // Predicated region
        $region25: #{basic_block_pallas.1} parent=11 // pred_check
          %p201 = pneg %p151
        $region26: #{basic_block_pallas.1} parent=11 // pred_check_branch
          %203 = sbr.rel (%p201) target = $region28
        $region27: #{basic_block_pallas.1} parent=11 // pred_region
          _
        $region28: #{basic_block_pallas.1} parent=11 // pred_fallthru
          _
      $region12: #{basic_block_pallas.1} parent=5 // pred_fallthru
        _
      %p204 = scmp.lt.s32.totalorder %s15, 2
      // Predicated region
      $region29: #{basic_block_pallas.1} parent=5 // pred_check
        %p205 = pneg %p204
      $region30: #{basic_block_pallas.1} parent=5 // pred_check_branch
        %207 = sbr.rel (%p205) target = $region32
      $region31: #{basic_block_pallas.1} parent=5 // pred_region
        // Predicated region
        $region33: #{basic_block_pallas.1} parent=31 // pred_check
          %p208 = pneg %p35
        $region34: #{basic_block_pallas.1} parent=31 // pred_check_branch
          %210 = sbr.rel (%p208) target = $region36
        $region35: #{basic_block_pallas.1} parent=31 // pred_region
          %s211 = smul.u32 32, %s15
          %p212 = scmp.lt.s32.totalorder %s211, 63
          %s213 = scalar_select %p212, %s211, 63
          %s214 = smul.addr %s213, 9
          %s215 = smul.addr %s214, 4
          %s216 = scalar_lea.vmem %s0, %s215
          %s217 = smul.u32 32, %s15
        $region36: #{basic_block_pallas.1} parent=31 // pred_fallthru
          _
        // Predicated region
        $region37: #{basic_block_pallas.1} parent=31 // pred_check
          %p218 = pneg %p61
        $region38: #{basic_block_pallas.1} parent=31 // pred_check_branch
          %220 = sbr.rel (%p218) target = $region40
        $region39: #{basic_block_pallas.1} parent=31 // pred_region
          %s221 = smul.u32 32, %s15
          %p222 = scmp.lt.s32.totalorder %s221, 63
          %s223 = scalar_select %p222, %s221, 63
          %s224 = smul.addr %s223, 8
          %s225 = scalar_lea.vmem %s1, %s224
          %s226 = smul.u32 32, %s15
        $region40: #{basic_block_pallas.1} parent=31 // pred_fallthru
          _
      $region32: #{basic_block_pallas.1} parent=5 // pred_fallthru
        _
      %p227 = scmp.le.s32.totalorder 1, %s15
      %p228 = scmp.lt.s32.totalorder %s15, 3
      %p229 = pnand %p227, %p228
      %p230 = pneg %p229
      // Predicated region
      $region41: #{basic_block_pallas.1} parent=5 // pred_check
        _
      $region42: #{basic_block_pallas.1} parent=5 // pred_check_branch
        %232 = sbr.rel (%p229) target = $region44
      $region43: #{basic_block_pallas.1} parent=5 // pred_region
        %s233 = ssub.s32 %s15, 1
        %s234 = smul.u32 32, %s20
        %p235 = scmp.lt.s32.totalorder %s234, 63
        %s236 = scalar_select %p235, %s234, 63
        %s237 = smul.addr %s236, 9
        %s238 = smul.addr %s237, 4
        %s239 = scalar_lea.vmem %s0, %s238
        %p240 = pneg %p41
        %p241 = pneg %p38
        %s242 = smul.u32 32, %s20
        %p243 = scmp.lt.s32.totalorder %s242, 63
        %s244 = scalar_select %p243, %s242, 63
        %s245 = smul.addr %s244, 8
        %s246 = scalar_lea.vmem %s1, %s245
        %p247 = pneg %p67
        %p248 = pneg %p64
        %p249 = pneg %p88
        %p250 = pneg %p85
        %p251 = pneg %p109
        %p252 = pneg %p106
        %p253 = pneg %p130
        %p254 = pneg %p127
        %p255 = pneg %p151
        %p256 = pneg %p148
        %p257 = pneg %p177
        %p258 = pneg %p174
        %s259 = sand.u32 %s164, 1
        %s260 = scalar_lea.sflag [#allocation3], %s259
        %s261 = sand.u32 %s164, 1
        %s262 = smul.addr %s261, 256
        %s263 = scalar_lea.vmem [#allocation2], %s262
        %s264 = smul.u32 32, %s20
        %p265 = scmp.lt.s32.totalorder %s264, 63
        %s266 = scalar_select %p265, %s264, 63
        %s267 = smul.addr %s266, 9
        %s268 = smul.addr %s267, 4
        %s269 = scalar_lea.vmem %s0, %s268
        %s270 = smul.u32 32, %s20
        %s271 = smul.u32 32, %s20
        %p272 = scmp.lt.s32.totalorder %s271, 63
        %s273 = scalar_select %p272, %s271, 63
        %s274 = smul.addr %s273, 8
        %s275 = scalar_lea.vmem %s1, %s274
        %s276 = smul.u32 32, %s20
        %s277 = smul.u32 32, %s20
        %v278 = vld [vmem:[%s269] sm:$0xff]
        %v279 = vld [vmem:[%s269 + $0x8] sm:$0xff]
        %v280 = vld [vmem:[%s269 + $0x10] sm:$0xff]
        %v281 = vld [vmem:[%s269 + $0x18] sm:$0xff]
        %v282 = vld [vmem:[%s269 + $0x20] sm:$0xf]
        %v283 = vld [vmem:[%s269 + $0x24] sm:$0xff]
        %v284 = vld [vmem:[%s269 + $0x2c] sm:$0xff]
        %v285 = vld [vmem:[%s269 + $0x34] sm:$0xff]
        %v286 = vld [vmem:[%s269 + $0x3c] sm:$0xff]
        %v287 = vld [vmem:[%s269 + $0x44] sm:$0xf]
        %v288 = vld [vmem:[%s269 + $0x48] sm:$0xff]
        %v289 = vld [vmem:[%s269 + $0x50] sm:$0xff]
        %v290 = vld [vmem:[%s269 + $0x58] sm:$0xff]
        %v291 = vld [vmem:[%s269 + $0x60] sm:$0xff]
        %v292 = vld [vmem:[%s269 + $0x68] sm:$0xf]
        %v293 = vld [vmem:[%s269 + $0x6c] sm:$0xff]
        %v294 = vld [vmem:[%s269 + $0x74] sm:$0xff]
        %v295 = vld [vmem:[%s269 + $0x7c] sm:$0xff]
        %v296 = vld [vmem:[%s269 + $0x84] sm:$0xff]
        %v297 = vld [vmem:[%s269 + $0x8c] sm:$0xf]
        %v298 = vld [vmem:[%s269 + $0x90] sm:$0xff]
        %v299 = vld [vmem:[%s269 + $0x98] sm:$0xff]
        %v300 = vld [vmem:[%s269 + $0xa0] sm:$0xff]
        %v301 = vld [vmem:[%s269 + $0xa8] sm:$0xff]
        %v302 = vld [vmem:[%s269 + $0xb0] sm:$0xf]
        %v303 = vld [vmem:[%s269 + $0xb4] sm:$0xff]
        %v304 = vld [vmem:[%s269 + $0xbc] sm:$0xff]
        %v305 = vld [vmem:[%s269 + $0xc4] sm:$0xff]
        %v306 = vld [vmem:[%s269 + $0xcc] sm:$0xff]
        %v307 = vld [vmem:[%s269 + $0xd4] sm:$0xf]
        %v308 = vld [vmem:[%s269 + $0xd8] sm:$0xff]
        %v309 = vld [vmem:[%s269 + $0xe0] sm:$0xff]
        %v310 = vld [vmem:[%s269 + $0xe8] sm:$0xff]
        %v311 = vld [vmem:[%s269 + $0xf0] sm:$0xff]
        %v312 = vld [vmem:[%s269 + $0xf8] sm:$0xf]
        %v313 = vld [vmem:[%s269 + $0xfc] sm:$0xff]
        %v314 = vld [vmem:[%s269 + $0x104] sm:$0xff]
        %v315 = vld [vmem:[%s269 + $0x10c] sm:$0xff]
        %v316 = vld [vmem:[%s269 + $0x114] sm:$0xff]
        %v317 = vld [vmem:[%s269 + $0x11c] sm:$0xf]
        %v318 = vld [vmem:[%s269 + $0x120] sm:$0xff]
        %v319 = vld [vmem:[%s269 + $0x128] sm:$0xff]
        %v320 = vld [vmem:[%s269 + $0x130] sm:$0xff]
        %v321 = vld [vmem:[%s269 + $0x138] sm:$0xff]
        %v322 = vld [vmem:[%s269 + $0x140] sm:$0xf]
        %v323 = vld [vmem:[%s269 + $0x144] sm:$0xff]
        %v324 = vld [vmem:[%s269 + $0x14c] sm:$0xff]
        %v325 = vld [vmem:[%s269 + $0x154] sm:$0xff]
        %v326 = vld [vmem:[%s269 + $0x15c] sm:$0xff]
        %v327 = vld [vmem:[%s269 + $0x164] sm:$0xf]
        %v328 = vld [vmem:[%s269 + $0x168] sm:$0xff]
        %v329 = vld [vmem:[%s269 + $0x170] sm:$0xff]
        %v330 = vld [vmem:[%s269 + $0x178] sm:$0xff]
        %v331 = vld [vmem:[%s269 + $0x180] sm:$0xff]
        %v332 = vld [vmem:[%s269 + $0x188] sm:$0xf]
        %v333 = vld [vmem:[%s269 + $0x18c] sm:$0xff]
        %v334 = vld [vmem:[%s269 + $0x194] sm:$0xff]
        %v335 = vld [vmem:[%s269 + $0x19c] sm:$0xff]
        %v336 = vld [vmem:[%s269 + $0x1a4] sm:$0xff]
        %v337 = vld [vmem:[%s269 + $0x1ac] sm:$0xf]
        %v338 = vld [vmem:[%s269 + $0x1b0] sm:$0xff]
        %v339 = vld [vmem:[%s269 + $0x1b8] sm:$0xff]
        %v340 = vld [vmem:[%s269 + $0x1c0] sm:$0xff]
        %v341 = vld [vmem:[%s269 + $0x1c8] sm:$0xff]
        %v342 = vld [vmem:[%s269 + $0x1d0] sm:$0xf]
        %v343 = vld [vmem:[%s269 + $0x1d4] sm:$0xff]
        %v344 = vld [vmem:[%s269 + $0x1dc] sm:$0xff]
        %v345 = vld [vmem:[%s269 + $0x1e4] sm:$0xff]
        %v346 = vld [vmem:[%s269 + $0x1ec] sm:$0xff]
        %v347 = vld [vmem:[%s269 + $0x1f4] sm:$0xf]
        %v348 = vld [vmem:[%s269 + $0x1f8] sm:$0xff]
        %v349 = vld [vmem:[%s269 + $0x200] sm:$0xff]
        %v350 = vld [vmem:[%s269 + $0x208] sm:$0xff]
        %v351 = vld [vmem:[%s269 + $0x210] sm:$0xff]
        %v352 = vld [vmem:[%s269 + $0x218] sm:$0xf]
        %v353 = vld [vmem:[%s269 + $0x21c] sm:$0xff]
        %v354 = vld [vmem:[%s269 + $0x224] sm:$0xff]
        %v355 = vld [vmem:[%s269 + $0x22c] sm:$0xff]
        %v356 = vld [vmem:[%s269 + $0x234] sm:$0xff]
        %v357 = vld [vmem:[%s269 + $0x23c] sm:$0xf]
        %v358 = vld [vmem:[%s269 + $0x240] sm:$0xff]
        %v359 = vld [vmem:[%s269 + $0x248] sm:$0xff]
        %v360 = vld [vmem:[%s269 + $0x250] sm:$0xff]
        %v361 = vld [vmem:[%s269 + $0x258] sm:$0xff]
        %v362 = vld [vmem:[%s269 + $0x260] sm:$0xf]
        %v363 = vld [vmem:[%s269 + $0x264] sm:$0xff]
        %v364 = vld [vmem:[%s269 + $0x26c] sm:$0xff]
        %v365 = vld [vmem:[%s269 + $0x274] sm:$0xff]
        %v366 = vld [vmem:[%s269 + $0x27c] sm:$0xff]
        %v367 = vld [vmem:[%s269 + $0x284] sm:$0xf]
        %v368 = vld [vmem:[%s269 + $0x288] sm:$0xff]
        %v369 = vld [vmem:[%s269 + $0x290] sm:$0xff]
        %v370 = vld [vmem:[%s269 + $0x298] sm:$0xff]
        %v371 = vld [vmem:[%s269 + $0x2a0] sm:$0xff]
        %v372 = vld [vmem:[%s269 + $0x2a8] sm:$0xf]
        %v373 = vld [vmem:[%s269 + $0x2ac] sm:$0xff]
        %v374 = vld [vmem:[%s269 + $0x2b4] sm:$0xff]
        %v375 = vld [vmem:[%s269 + $0x2bc] sm:$0xff]
        %v376 = vld [vmem:[%s269 + $0x2c4] sm:$0xff]
        %v377 = vld [vmem:[%s269 + $0x2cc] sm:$0xf]
        %v378 = vld [vmem:[%s269 + $0x2d0] sm:$0xff]
        %v379 = vld [vmem:[%s269 + $0x2d8] sm:$0xff]
        %v380 = vld [vmem:[%s269 + $0x2e0] sm:$0xff]
        %v381 = vld [vmem:[%s269 + $0x2e8] sm:$0xff]
        %v382 = vld [vmem:[%s269 + $0x2f0] sm:$0xf]
        %v383 = vld [vmem:[%s269 + $0x2f4] sm:$0xff]
        %v384 = vld [vmem:[%s269 + $0x2fc] sm:$0xff]
        %v385 = vld [vmem:[%s269 + $0x304] sm:$0xff]
        %v386 = vld [vmem:[%s269 + $0x30c] sm:$0xff]
        %v387 = vld [vmem:[%s269 + $0x314] sm:$0xf]
        %v388 = vld [vmem:[%s269 + $0x318] sm:$0xff]
        %v389 = vld [vmem:[%s269 + $0x320] sm:$0xff]
        %v390 = vld [vmem:[%s269 + $0x328] sm:$0xff]
        %v391 = vld [vmem:[%s269 + $0x330] sm:$0xff]
        %v392 = vld [vmem:[%s269 + $0x338] sm:$0xf]
        %v393 = vld [vmem:[%s269 + $0x33c] sm:$0xff]
        %v394 = vld [vmem:[%s269 + $0x344] sm:$0xff]
        %v395 = vld [vmem:[%s269 + $0x34c] sm:$0xff]
        %v396 = vld [vmem:[%s269 + $0x354] sm:$0xff]
        %v397 = vld [vmem:[%s269 + $0x35c] sm:$0xf]
        %v398 = vld [vmem:[%s269 + $0x360] sm:$0xff]
        %v399 = vld [vmem:[%s269 + $0x368] sm:$0xff]
        %v400 = vld [vmem:[%s269 + $0x370] sm:$0xff]
        %v401 = vld [vmem:[%s269 + $0x378] sm:$0xff]
        %v402 = vld [vmem:[%s269 + $0x380] sm:$0xf]
        %v403 = vld [vmem:[%s269 + $0x384] sm:$0xff]
        %v404 = vld [vmem:[%s269 + $0x38c] sm:$0xff]
        %v405 = vld [vmem:[%s269 + $0x394] sm:$0xff]
        %v406 = vld [vmem:[%s269 + $0x39c] sm:$0xff]
        %v407 = vld [vmem:[%s269 + $0x3a4] sm:$0xf]
        %v408 = vld [vmem:[%s269 + $0x3a8] sm:$0xff]
        %v409 = vld [vmem:[%s269 + $0x3b0] sm:$0xff]
        %v410 = vld [vmem:[%s269 + $0x3b8] sm:$0xff]
        %v411 = vld [vmem:[%s269 + $0x3c0] sm:$0xff]
        %v412 = vld [vmem:[%s269 + $0x3c8] sm:$0xf]
        %v413 = vld [vmem:[%s269 + $0x3cc] sm:$0xff]
        %v414 = vld [vmem:[%s269 + $0x3d4] sm:$0xff]
        %v415 = vld [vmem:[%s269 + $0x3dc] sm:$0xff]
        %v416 = vld [vmem:[%s269 + $0x3e4] sm:$0xff]
        %v417 = vld [vmem:[%s269 + $0x3ec] sm:$0xf]
        %v418 = vld [vmem:[%s269 + $0x3f0] sm:$0xff]
        %v419 = vld [vmem:[%s269 + $0x3f8] sm:$0xff]
        %v420 = vld [vmem:[%s269 + $0x400] sm:$0xff]
        %v421 = vld [vmem:[%s269 + $0x408] sm:$0xff]
        %v422 = vld [vmem:[%s269 + $0x410] sm:$0xf]
        %v423 = vld [vmem:[%s269 + $0x414] sm:$0xff]
        %v424 = vld [vmem:[%s269 + $0x41c] sm:$0xff]
        %v425 = vld [vmem:[%s269 + $0x424] sm:$0xff]
        %v426 = vld [vmem:[%s269 + $0x42c] sm:$0xff]
        %v427 = vld [vmem:[%s269 + $0x434] sm:$0xf]
        %v428 = vld [vmem:[%s269 + $0x438] sm:$0xff]
        %v429 = vld [vmem:[%s269 + $0x440] sm:$0xff]
        %v430 = vld [vmem:[%s269 + $0x448] sm:$0xff]
        %v431 = vld [vmem:[%s269 + $0x450] sm:$0xff]
        %v432 = vld [vmem:[%s269 + $0x458] sm:$0xf]
        %v433 = vld [vmem:[%s269 + $0x45c] sm:$0xff]
        %v434 = vld [vmem:[%s269 + $0x464] sm:$0xff]
        %v435 = vld [vmem:[%s269 + $0x46c] sm:$0xff]
        %v436 = vld [vmem:[%s269 + $0x474] sm:$0xff]
        %v437 = vld [vmem:[%s269 + $0x47c] sm:$0xf]
        %v438 = vld [vmem:[%s2] sm:$0xf]
        %v439 = vld [vmem:[%s2 + $0x4] sm:$0xf]
        %v440 = vld [vmem:[%s2 + $0x8] sm:$0xf]
        %v441 = vld [vmem:[%s2 + $0xc] sm:$0xf]
        %v442 = vld [vmem:[%s2 + $0x10] sm:$0xf]
        %v443 = vld [vmem:[%s2 + $0x14] sm:$0xf]
        %v444 = vld [vmem:[%s2 + $0x18] sm:$0xf]
        %v445 = vld [vmem:[%s2 + $0x1c] sm:$0xf]
        %v446 = vld [vmem:[%s2 + $0x20] sm:$0xf]
        %v447 = vld [vmem:[%s2 + $0x24] sm:$0xf]
        %v448 = vld [vmem:[%s2 + $0x28] sm:$0xf]
        %v449 = vld [vmem:[%s2 + $0x2c] sm:$0xf]
        %v450 = vld [vmem:[%s2 + $0x30] sm:$0xf]
        %v451 = vld [vmem:[%s2 + $0x34] sm:$0xf]
        %v452 = vld [vmem:[%s2 + $0x38] sm:$0xf]
        %v453 = vld [vmem:[%s2 + $0x3c] sm:$0xf]
        %v454 = vld [vmem:[%s2 + $0x40] sm:$0xf]
        %v455 = vld [vmem:[%s2 + $0x44] sm:$0xf]
        %v456 = vld [vmem:[%s2 + $0x48] sm:$0xf]
        %v457 = vld [vmem:[%s2 + $0x4c] sm:$0xf]
        %v458 = vld [vmem:[%s2 + $0x50] sm:$0xf]
        %v459 = vld [vmem:[%s2 + $0x54] sm:$0xf]
        %v460 = vld [vmem:[%s2 + $0x58] sm:$0xf]
        %v461 = vld [vmem:[%s2 + $0x5c] sm:$0xf]
        %v462 = vld [vmem:[%s2 + $0x60] sm:$0xf]
        %v463 = vld [vmem:[%s2 + $0x64] sm:$0xf]
        %v464 = vld [vmem:[%s2 + $0x68] sm:$0xf]
        %v465 = vld [vmem:[%s2 + $0x6c] sm:$0xf]
        %v466 = vld [vmem:[%s2 + $0x70] sm:$0xf]
        %v467 = vld [vmem:[%s2 + $0x74] sm:$0xf]
        %v468 = vld [vmem:[%s2 + $0x78] sm:$0xf]
        %v469 = vld [vmem:[%s2 + $0x7c] sm:$0xf]
        %v470 = vld [vmem:[%s2 + $0x80] sm:$0xf]
        %v471 = vld [vmem:[%s2 + $0x84] sm:$0xf]
        %v472 = vld [vmem:[%s2 + $0x88] sm:$0xf]
        %v473 = vld [vmem:[%s2 + $0x8c] sm:$0xf]
        %v474 = vld [vmem:[%s2 + $0x90] sm:$0xf]
        %v475 = vld [vmem:[%s2 + $0x94] sm:$0xf]
        %v476 = vld [vmem:[%s2 + $0x98] sm:$0xf]
        %v477 = vld [vmem:[%s2 + $0x9c] sm:$0xf]
        %v478 = vld [vmem:[%s2 + $0xa0] sm:$0xf]
        %v479 = vld [vmem:[%s2 + $0xa4] sm:$0xf]
        %v480 = vld [vmem:[%s2 + $0xa8] sm:$0xf]
        %v481 = vld [vmem:[%s2 + $0xac] sm:$0xf]
        %v482 = vld [vmem:[%s2 + $0xb0] sm:$0xf]
        %v483 = vld [vmem:[%s2 + $0xb4] sm:$0xf]
        %v484 = vld [vmem:[%s2 + $0xb8] sm:$0xf]
        %v485 = vld [vmem:[%s2 + $0xbc] sm:$0xf]
        %v486 = vld [vmem:[%s2 + $0xc0] sm:$0xf]
        %v487 = vld [vmem:[%s2 + $0xc4] sm:$0xf]
        %v488 = vld [vmem:[%s2 + $0xc8] sm:$0xf]
        %v489 = vld [vmem:[%s2 + $0xcc] sm:$0xf]
        %v490 = vld [vmem:[%s2 + $0xd0] sm:$0xf]
        %v491 = vld [vmem:[%s2 + $0xd4] sm:$0xf]
        %v492 = vld [vmem:[%s2 + $0xd8] sm:$0xf]
        %v493 = vld [vmem:[%s2 + $0xdc] sm:$0xf]
        %v494 = vld [vmem:[%s2 + $0xe0] sm:$0xf]
        %v495 = vld [vmem:[%s2 + $0xe4] sm:$0xf]
        %v496 = vld [vmem:[%s2 + $0xe8] sm:$0xf]
        %v497 = vld [vmem:[%s2 + $0xec] sm:$0xf]
        %v498 = vld [vmem:[%s2 + $0xf0] sm:$0xf]
        %v499 = vld [vmem:[%s2 + $0xf4] sm:$0xf]
        %v500 = vld [vmem:[%s2 + $0xf8] sm:$0xf]
        %v501 = vld [vmem:[%s2 + $0xfc] sm:$0xf]
        %v502 = vld [vmem:[%s2 + $0x100] sm:$0xf]
        %v503 = vld [vmem:[%s2 + $0x104] sm:$0xf]
        %v504 = vld [vmem:[%s2 + $0x108] sm:$0xf]
        %v505 = vld [vmem:[%s2 + $0x10c] sm:$0xf]
        %v506 = vld [vmem:[%s2 + $0x110] sm:$0xf]
        %v507 = vld [vmem:[%s2 + $0x114] sm:$0xf]
        %v508 = vld [vmem:[%s2 + $0x118] sm:$0xf]
        %v509 = vld [vmem:[%s2 + $0x11c] sm:$0xf]
        %v510 = vld [vmem:[%s2 + $0x120] sm:$0xf]
        %v511 = vld [vmem:[%s2 + $0x124] sm:$0xf]
        %v512 = vld [vmem:[%s2 + $0x128] sm:$0xf]
        %v513 = vld [vmem:[%s2 + $0x12c] sm:$0xf]
        %v514 = vld [vmem:[%s2 + $0x130] sm:$0xf]
        %v515 = vld [vmem:[%s2 + $0x134] sm:$0xf]
        %v516 = vld [vmem:[%s2 + $0x138] sm:$0xf]
        %v517 = vld [vmem:[%s2 + $0x13c] sm:$0xf]
        %v518 = vld [vmem:[%s2 + $0x140] sm:$0xf]
        %v519 = vld [vmem:[%s2 + $0x144] sm:$0xf]
        %v520 = vld [vmem:[%s2 + $0x148] sm:$0xf]
        %v521 = vld [vmem:[%s2 + $0x14c] sm:$0xf]
        %v522 = vld [vmem:[%s2 + $0x150] sm:$0xf]
        %v523 = vld [vmem:[%s2 + $0x154] sm:$0xf]
        %v524 = vld [vmem:[%s2 + $0x158] sm:$0xf]
        %v525 = vld [vmem:[%s2 + $0x15c] sm:$0xf]
        %v526 = vld [vmem:[%s2 + $0x160] sm:$0xf]
        %v527 = vld [vmem:[%s2 + $0x164] sm:$0xf]
        %v528 = vld [vmem:[%s2 + $0x168] sm:$0xf]
        %v529 = vld [vmem:[%s2 + $0x16c] sm:$0xf]
        %v530 = vld [vmem:[%s2 + $0x170] sm:$0xf]
        %v531 = vld [vmem:[%s2 + $0x174] sm:$0xf]
        %v532 = vld [vmem:[%s2 + $0x178] sm:$0xf]
        %v533 = vld [vmem:[%s2 + $0x17c] sm:$0xf]
        %v534 = vld [vmem:[%s2 + $0x180] sm:$0xf]
        %v535 = vld [vmem:[%s2 + $0x184] sm:$0xf]
        %v536 = vld [vmem:[%s2 + $0x188] sm:$0xf]
        %v537 = vld [vmem:[%s2 + $0x18c] sm:$0xf]
        %v538 = vld [vmem:[%s2 + $0x190] sm:$0xf]
        %v539 = vld [vmem:[%s2 + $0x194] sm:$0xf]
        %v540 = vld [vmem:[%s2 + $0x198] sm:$0xf]
        %v541 = vld [vmem:[%s2 + $0x19c] sm:$0xf]
        %v542 = vld [vmem:[%s2 + $0x1a0] sm:$0xf]
        %v543 = vld [vmem:[%s2 + $0x1a4] sm:$0xf]
        %v544 = vld [vmem:[%s2 + $0x1a8] sm:$0xf]
        %v545 = vld [vmem:[%s2 + $0x1ac] sm:$0xf]
        %v546 = vld [vmem:[%s2 + $0x1b0] sm:$0xf]
        %v547 = vld [vmem:[%s2 + $0x1b4] sm:$0xf]
        %v548 = vld [vmem:[%s2 + $0x1b8] sm:$0xf]
        %v549 = vld [vmem:[%s2 + $0x1bc] sm:$0xf]
        %v550 = vld [vmem:[%s2 + $0x1c0] sm:$0xf]
        %v551 = vld [vmem:[%s2 + $0x1c4] sm:$0xf]
        %v552 = vld [vmem:[%s2 + $0x1c8] sm:$0xf]
        %v553 = vld [vmem:[%s2 + $0x1cc] sm:$0xf]
        %v554 = vld [vmem:[%s2 + $0x1d0] sm:$0xf]
        %v555 = vld [vmem:[%s2 + $0x1d4] sm:$0xf]
        %v556 = vld [vmem:[%s2 + $0x1d8] sm:$0xf]
        %v557 = vld [vmem:[%s2 + $0x1dc] sm:$0xf]
        %v558 = vld [vmem:[%s2 + $0x1e0] sm:$0xf]
        %v559 = vld [vmem:[%s2 + $0x1e4] sm:$0xf]
        %v560 = vld [vmem:[%s2 + $0x1e8] sm:$0xf]
        %v561 = vld [vmem:[%s2 + $0x1ec] sm:$0xf]
        %v562 = vld [vmem:[%s2 + $0x1f0] sm:$0xf]
        %v563 = vld [vmem:[%s2 + $0x1f4] sm:$0xf]
        %v564 = vld [vmem:[%s2 + $0x1f8] sm:$0xf]
        %v565 = vld [vmem:[%s2 + $0x1fc] sm:$0xf]
        %v566 = vld [vmem:[%s2 + $0x200] sm:$0xf]
        %v567 = vld [vmem:[%s2 + $0x204] sm:$0xf]
        %v568 = vld [vmem:[%s2 + $0x208] sm:$0xf]
        %v569 = vld [vmem:[%s2 + $0x20c] sm:$0xf]
        %v570 = vld [vmem:[%s2 + $0x210] sm:$0xf]
        %v571 = vld [vmem:[%s2 + $0x214] sm:$0xf]
        %v572 = vld [vmem:[%s2 + $0x218] sm:$0xf]
        %v573 = vld [vmem:[%s2 + $0x21c] sm:$0xf]
        %v574 = vld [vmem:[%s2 + $0x220] sm:$0xf]
        %v575 = vld [vmem:[%s2 + $0x224] sm:$0xf]
        %v576 = vld [vmem:[%s2 + $0x228] sm:$0xf]
        %v577 = vld [vmem:[%s2 + $0x22c] sm:$0xf]
        %v578 = vld [vmem:[%s2 + $0x230] sm:$0xf]
        %v579 = vld [vmem:[%s2 + $0x234] sm:$0xf]
        %v580 = vld [vmem:[%s2 + $0x238] sm:$0xf]
        %v581 = vld [vmem:[%s2 + $0x23c] sm:$0xf]
        %v582 = vld [vmem:[%s3] sm:$0x1]
        %v584 = vperm.slane %v582, 0
        %v746 = vunpack.c.l.b16 %v278
        %v747 = vunpack.c.h.b16 %v278
        %v748 = vunpack.c.l.b16 %v279
        %v749 = vunpack.c.h.b16 %v279
        %v750 = vunpack.c.l.b16 %v280
        %v751 = vunpack.c.h.b16 %v280
        %v752 = vunpack.c.l.b16 %v281
        %v753 = vunpack.c.h.b16 %v281
        %v754 = vunpack.c.l.b16 %v282
        %v755 = vunpack.c.l.b16 %v283
        %v756 = vunpack.c.h.b16 %v283
        %v757 = vunpack.c.l.b16 %v284
        %v758 = vunpack.c.h.b16 %v284
        %v759 = vunpack.c.l.b16 %v285
        %v760 = vunpack.c.h.b16 %v285
        %v761 = vunpack.c.l.b16 %v286
        %v762 = vunpack.c.h.b16 %v286
        %v763 = vunpack.c.l.b16 %v287
        %v764 = vunpack.c.l.b16 %v288
        %v765 = vunpack.c.h.b16 %v288
        %v766 = vunpack.c.l.b16 %v289
        %v767 = vunpack.c.h.b16 %v289
        %v768 = vunpack.c.l.b16 %v290
        %v769 = vunpack.c.h.b16 %v290
        %v770 = vunpack.c.l.b16 %v291
        %v771 = vunpack.c.h.b16 %v291
        %v772 = vunpack.c.l.b16 %v292
        %v773 = vunpack.c.l.b16 %v293
        %v774 = vunpack.c.h.b16 %v293
        %v775 = vunpack.c.l.b16 %v294
        %v776 = vunpack.c.h.b16 %v294
        %v777 = vunpack.c.l.b16 %v295
        %v778 = vunpack.c.h.b16 %v295
        %v779 = vunpack.c.l.b16 %v296
        %v780 = vunpack.c.h.b16 %v296
        %v781 = vunpack.c.l.b16 %v297
        %v782 = vunpack.c.l.b16 %v298
        %v783 = vunpack.c.h.b16 %v298
        %v784 = vunpack.c.l.b16 %v299
        %v785 = vunpack.c.h.b16 %v299
        %v786 = vunpack.c.l.b16 %v300
        %v787 = vunpack.c.h.b16 %v300
        %v788 = vunpack.c.l.b16 %v301
        %v789 = vunpack.c.h.b16 %v301
        %v790 = vunpack.c.l.b16 %v302
        %v791 = vunpack.c.l.b16 %v303
        %v792 = vunpack.c.h.b16 %v303
        %v793 = vunpack.c.l.b16 %v304
        %v794 = vunpack.c.h.b16 %v304
        %v795 = vunpack.c.l.b16 %v305
        %v796 = vunpack.c.h.b16 %v305
        %v797 = vunpack.c.l.b16 %v306
        %v798 = vunpack.c.h.b16 %v306
        %v799 = vunpack.c.l.b16 %v307
        %v800 = vunpack.c.l.b16 %v308
        %v801 = vunpack.c.h.b16 %v308
        %v802 = vunpack.c.l.b16 %v309
        %v803 = vunpack.c.h.b16 %v309
        %v804 = vunpack.c.l.b16 %v310
        %v805 = vunpack.c.h.b16 %v310
        %v806 = vunpack.c.l.b16 %v311
        %v807 = vunpack.c.h.b16 %v311
        %v808 = vunpack.c.l.b16 %v312
        %v809 = vunpack.c.l.b16 %v313
        %v810 = vunpack.c.h.b16 %v313
        %v811 = vunpack.c.l.b16 %v314
        %v812 = vunpack.c.h.b16 %v314
        %v813 = vunpack.c.l.b16 %v315
        %v814 = vunpack.c.h.b16 %v315
        %v815 = vunpack.c.l.b16 %v316
        %v816 = vunpack.c.h.b16 %v316
        %v817 = vunpack.c.l.b16 %v317
        %v818 = vunpack.c.l.b16 %v318
        %v819 = vunpack.c.h.b16 %v318
        %v820 = vunpack.c.l.b16 %v319
        %v821 = vunpack.c.h.b16 %v319
        %v822 = vunpack.c.l.b16 %v320
        %v823 = vunpack.c.h.b16 %v320
        %v824 = vunpack.c.l.b16 %v321
        %v825 = vunpack.c.h.b16 %v321
        %v826 = vunpack.c.l.b16 %v322
        %v827 = vunpack.c.l.b16 %v323
        %v828 = vunpack.c.h.b16 %v323
        %v829 = vunpack.c.l.b16 %v324
        %v830 = vunpack.c.h.b16 %v324
        %v831 = vunpack.c.l.b16 %v325
        %v832 = vunpack.c.h.b16 %v325
        %v833 = vunpack.c.l.b16 %v326
        %v834 = vunpack.c.h.b16 %v326
        %v835 = vunpack.c.l.b16 %v327
        %v836 = vunpack.c.l.b16 %v328
        %v837 = vunpack.c.h.b16 %v328
        %v838 = vunpack.c.l.b16 %v329
        %v839 = vunpack.c.h.b16 %v329
        %v840 = vunpack.c.l.b16 %v330
        %v841 = vunpack.c.h.b16 %v330
        %v842 = vunpack.c.l.b16 %v331
        %v843 = vunpack.c.h.b16 %v331
        %v844 = vunpack.c.l.b16 %v332
        %v845 = vunpack.c.l.b16 %v333
        %v846 = vunpack.c.h.b16 %v333
        %v847 = vunpack.c.l.b16 %v334
        %v848 = vunpack.c.h.b16 %v334
        %v849 = vunpack.c.l.b16 %v335
        %v850 = vunpack.c.h.b16 %v335
        %v851 = vunpack.c.l.b16 %v336
        %v852 = vunpack.c.h.b16 %v336
        %v853 = vunpack.c.l.b16 %v337
        %v854 = vunpack.c.l.b16 %v338
        %v855 = vunpack.c.h.b16 %v338
        %v856 = vunpack.c.l.b16 %v339
        %v857 = vunpack.c.h.b16 %v339
        %v858 = vunpack.c.l.b16 %v340
        %v859 = vunpack.c.h.b16 %v340
        %v860 = vunpack.c.l.b16 %v341
        %v861 = vunpack.c.h.b16 %v341
        %v862 = vunpack.c.l.b16 %v342
        %v863 = vunpack.c.l.b16 %v343
        %v864 = vunpack.c.h.b16 %v343
        %v865 = vunpack.c.l.b16 %v344
        %v866 = vunpack.c.h.b16 %v344
        %v867 = vunpack.c.l.b16 %v345
        %v868 = vunpack.c.h.b16 %v345
        %v869 = vunpack.c.l.b16 %v346
        %v870 = vunpack.c.h.b16 %v346
        %v871 = vunpack.c.l.b16 %v347
        %v872 = vunpack.c.l.b16 %v348
        %v873 = vunpack.c.h.b16 %v348
        %v874 = vunpack.c.l.b16 %v349
        %v875 = vunpack.c.h.b16 %v349
        %v876 = vunpack.c.l.b16 %v350
        %v877 = vunpack.c.h.b16 %v350
        %v878 = vunpack.c.l.b16 %v351
        %v879 = vunpack.c.h.b16 %v351
        %v880 = vunpack.c.l.b16 %v352
        %v881 = vunpack.c.l.b16 %v353
        %v882 = vunpack.c.h.b16 %v353
        %v883 = vunpack.c.l.b16 %v354
        %v884 = vunpack.c.h.b16 %v354
        %v885 = vunpack.c.l.b16 %v355
        %v886 = vunpack.c.h.b16 %v355
        %v887 = vunpack.c.l.b16 %v356
        %v888 = vunpack.c.h.b16 %v356
        %v889 = vunpack.c.l.b16 %v357
        %v890 = vunpack.c.l.b16 %v358
        %v891 = vunpack.c.h.b16 %v358
        %v892 = vunpack.c.l.b16 %v359
        %v893 = vunpack.c.h.b16 %v359
        %v894 = vunpack.c.l.b16 %v360
        %v895 = vunpack.c.h.b16 %v360
        %v896 = vunpack.c.l.b16 %v361
        %v897 = vunpack.c.h.b16 %v361
        %v898 = vunpack.c.l.b16 %v362
        %v899 = vunpack.c.l.b16 %v363
        %v900 = vunpack.c.h.b16 %v363
        %v901 = vunpack.c.l.b16 %v364
        %v902 = vunpack.c.h.b16 %v364
        %v903 = vunpack.c.l.b16 %v365
        %v904 = vunpack.c.h.b16 %v365
        %v905 = vunpack.c.l.b16 %v366
        %v906 = vunpack.c.h.b16 %v366
        %v907 = vunpack.c.l.b16 %v367
        %v908 = vunpack.c.l.b16 %v368
        %v909 = vunpack.c.h.b16 %v368
        %v910 = vunpack.c.l.b16 %v369
        %v911 = vunpack.c.h.b16 %v369
        %v912 = vunpack.c.l.b16 %v370
        %v913 = vunpack.c.h.b16 %v370
        %v914 = vunpack.c.l.b16 %v371
        %v915 = vunpack.c.h.b16 %v371
        %v916 = vunpack.c.l.b16 %v372
        %v917 = vunpack.c.l.b16 %v373
        %v918 = vunpack.c.h.b16 %v373
        %v919 = vunpack.c.l.b16 %v374
        %v920 = vunpack.c.h.b16 %v374
        %v921 = vunpack.c.l.b16 %v375
        %v922 = vunpack.c.h.b16 %v375
        %v923 = vunpack.c.l.b16 %v376
        %v924 = vunpack.c.h.b16 %v376
        %v925 = vunpack.c.l.b16 %v377
        %v926 = vunpack.c.l.b16 %v378
        %v927 = vunpack.c.h.b16 %v378
        %v928 = vunpack.c.l.b16 %v379
        %v929 = vunpack.c.h.b16 %v379
        %v930 = vunpack.c.l.b16 %v380
        %v931 = vunpack.c.h.b16 %v380
        %v932 = vunpack.c.l.b16 %v381
        %v933 = vunpack.c.h.b16 %v381
        %v934 = vunpack.c.l.b16 %v382
        %v935 = vunpack.c.l.b16 %v383
        %v936 = vunpack.c.h.b16 %v383
        %v937 = vunpack.c.l.b16 %v384
        %v938 = vunpack.c.h.b16 %v384
        %v939 = vunpack.c.l.b16 %v385
        %v940 = vunpack.c.h.b16 %v385
        %v941 = vunpack.c.l.b16 %v386
        %v942 = vunpack.c.h.b16 %v386
        %v943 = vunpack.c.l.b16 %v387
        %v944 = vunpack.c.l.b16 %v388
        %v945 = vunpack.c.h.b16 %v388
        %v946 = vunpack.c.l.b16 %v389
        %v947 = vunpack.c.h.b16 %v389
        %v948 = vunpack.c.l.b16 %v390
        %v949 = vunpack.c.h.b16 %v390
        %v950 = vunpack.c.l.b16 %v391
        %v951 = vunpack.c.h.b16 %v391
        %v952 = vunpack.c.l.b16 %v392
        %v953 = vunpack.c.l.b16 %v393
        %v954 = vunpack.c.h.b16 %v393
        %v955 = vunpack.c.l.b16 %v394
        %v956 = vunpack.c.h.b16 %v394
        %v957 = vunpack.c.l.b16 %v395
        %v958 = vunpack.c.h.b16 %v395
        %v959 = vunpack.c.l.b16 %v396
        %v960 = vunpack.c.h.b16 %v396
        %v961 = vunpack.c.l.b16 %v397
        %v962 = vunpack.c.l.b16 %v398
        %v963 = vunpack.c.h.b16 %v398
        %v964 = vunpack.c.l.b16 %v399
        %v965 = vunpack.c.h.b16 %v399
        %v966 = vunpack.c.l.b16 %v400
        %v967 = vunpack.c.h.b16 %v400
        %v968 = vunpack.c.l.b16 %v401
        %v969 = vunpack.c.h.b16 %v401
        %v970 = vunpack.c.l.b16 %v402
        %v971 = vunpack.c.l.b16 %v403
        %v972 = vunpack.c.h.b16 %v403
        %v973 = vunpack.c.l.b16 %v404
        %v974 = vunpack.c.h.b16 %v404
        %v975 = vunpack.c.l.b16 %v405
        %v976 = vunpack.c.h.b16 %v405
        %v977 = vunpack.c.l.b16 %v406
        %v978 = vunpack.c.h.b16 %v406
        %v979 = vunpack.c.l.b16 %v407
        %v980 = vunpack.c.l.b16 %v408
        %v981 = vunpack.c.h.b16 %v408
        %v982 = vunpack.c.l.b16 %v409
        %v983 = vunpack.c.h.b16 %v409
        %v984 = vunpack.c.l.b16 %v410
        %v985 = vunpack.c.h.b16 %v410
        %v986 = vunpack.c.l.b16 %v411
        %v987 = vunpack.c.h.b16 %v411
        %v988 = vunpack.c.l.b16 %v412
        %v989 = vunpack.c.l.b16 %v413
        %v990 = vunpack.c.h.b16 %v413
        %v991 = vunpack.c.l.b16 %v414
        %v992 = vunpack.c.h.b16 %v414
        %v993 = vunpack.c.l.b16 %v415
        %v994 = vunpack.c.h.b16 %v415
        %v995 = vunpack.c.l.b16 %v416
        %v996 = vunpack.c.h.b16 %v416
        %v997 = vunpack.c.l.b16 %v417
        %v998 = vunpack.c.l.b16 %v418
        %v999 = vunpack.c.h.b16 %v418
        %v1000 = vunpack.c.l.b16 %v419
        %v1001 = vunpack.c.h.b16 %v419
        %v1002 = vunpack.c.l.b16 %v420
        %v1003 = vunpack.c.h.b16 %v420
        %v1004 = vunpack.c.l.b16 %v421
        %v1005 = vunpack.c.h.b16 %v421
        %v1006 = vunpack.c.l.b16 %v422
        %v1007 = vunpack.c.l.b16 %v423
        %v1008 = vunpack.c.h.b16 %v423
        %v1009 = vunpack.c.l.b16 %v424
        %v1010 = vunpack.c.h.b16 %v424
        %v1011 = vunpack.c.l.b16 %v425
        %v1012 = vunpack.c.h.b16 %v425
        %v1013 = vunpack.c.l.b16 %v426
        %v1014 = vunpack.c.h.b16 %v426
        %v1015 = vunpack.c.l.b16 %v427
        %v1016 = vunpack.c.l.b16 %v428
        %v1017 = vunpack.c.h.b16 %v428
        %v1018 = vunpack.c.l.b16 %v429
        %v1019 = vunpack.c.h.b16 %v429
        %v1020 = vunpack.c.l.b16 %v430
        %v1021 = vunpack.c.h.b16 %v430
        %v1022 = vunpack.c.l.b16 %v431
        %v1023 = vunpack.c.h.b16 %v431
        %v1024 = vunpack.c.l.b16 %v432
        %v1025 = vunpack.c.l.b16 %v433
        %v1026 = vunpack.c.h.b16 %v433
        %v1027 = vunpack.c.l.b16 %v434
        %v1028 = vunpack.c.h.b16 %v434
        %v1029 = vunpack.c.l.b16 %v435
        %v1030 = vunpack.c.h.b16 %v435
        %v1031 = vunpack.c.l.b16 %v436
        %v1032 = vunpack.c.h.b16 %v436
        %v1033 = vunpack.c.l.b16 %v437
        %v1034 = vpack.c.b16 %v755, %v746
        %v1035 = vpack.c.b16 %v756, %v747
        %v1036 = vpack.c.b16 %v757, %v748
        %v1037 = vpack.c.b16 %v758, %v749
        %v1038 = vpack.c.b16 %v759, %v750
        %v1039 = vpack.c.b16 %v760, %v751
        %v1040 = vpack.c.b16 %v761, %v752
        %v1041 = vpack.c.b16 %v762, %v753
        %v1042 = vpack.c.b16 %v763, %v754
        %v1043 = vpack.c.b16 %v773, %v764
        %v1044 = vpack.c.b16 %v774, %v765
        %v1045 = vpack.c.b16 %v775, %v766
        %v1046 = vpack.c.b16 %v776, %v767
        %v1047 = vpack.c.b16 %v777, %v768
        %v1048 = vpack.c.b16 %v778, %v769
        %v1049 = vpack.c.b16 %v779, %v770
        %v1050 = vpack.c.b16 %v780, %v771
        %v1051 = vpack.c.b16 %v781, %v772
        %v1052 = vpack.c.b16 %v791, %v782
        %v1053 = vpack.c.b16 %v792, %v783
        %v1054 = vpack.c.b16 %v793, %v784
        %v1055 = vpack.c.b16 %v794, %v785
        %v1056 = vpack.c.b16 %v795, %v786
        %v1057 = vpack.c.b16 %v796, %v787
        %v1058 = vpack.c.b16 %v797, %v788
        %v1059 = vpack.c.b16 %v798, %v789
        %v1060 = vpack.c.b16 %v799, %v790
        %v1061 = vpack.c.b16 %v809, %v800
        %v1062 = vpack.c.b16 %v810, %v801
        %v1063 = vpack.c.b16 %v811, %v802
        %v1064 = vpack.c.b16 %v812, %v803
        %v1065 = vpack.c.b16 %v813, %v804
        %v1066 = vpack.c.b16 %v814, %v805
        %v1067 = vpack.c.b16 %v815, %v806
        %v1068 = vpack.c.b16 %v816, %v807
        %v1069 = vpack.c.b16 %v817, %v808
        %v1070 = vpack.c.b16 %v827, %v818
        %v1071 = vpack.c.b16 %v828, %v819
        %v1072 = vpack.c.b16 %v829, %v820
        %v1073 = vpack.c.b16 %v830, %v821
        %v1074 = vpack.c.b16 %v831, %v822
        %v1075 = vpack.c.b16 %v832, %v823
        %v1076 = vpack.c.b16 %v833, %v824
        %v1077 = vpack.c.b16 %v834, %v825
        %v1078 = vpack.c.b16 %v835, %v826
        %v1079 = vpack.c.b16 %v845, %v836
        %v1080 = vpack.c.b16 %v846, %v837
        %v1081 = vpack.c.b16 %v847, %v838
        %v1082 = vpack.c.b16 %v848, %v839
        %v1083 = vpack.c.b16 %v849, %v840
        %v1084 = vpack.c.b16 %v850, %v841
        %v1085 = vpack.c.b16 %v851, %v842
        %v1086 = vpack.c.b16 %v852, %v843
        %v1087 = vpack.c.b16 %v853, %v844
        %v1088 = vpack.c.b16 %v863, %v854
        %v1089 = vpack.c.b16 %v864, %v855
        %v1090 = vpack.c.b16 %v865, %v856
        %v1091 = vpack.c.b16 %v866, %v857
        %v1092 = vpack.c.b16 %v867, %v858
        %v1093 = vpack.c.b16 %v868, %v859
        %v1094 = vpack.c.b16 %v869, %v860
        %v1095 = vpack.c.b16 %v870, %v861
        %v1096 = vpack.c.b16 %v871, %v862
        %v1097 = vpack.c.b16 %v881, %v872
        %v1098 = vpack.c.b16 %v882, %v873
        %v1099 = vpack.c.b16 %v883, %v874
        %v1100 = vpack.c.b16 %v884, %v875
        %v1101 = vpack.c.b16 %v885, %v876
        %v1102 = vpack.c.b16 %v886, %v877
        %v1103 = vpack.c.b16 %v887, %v878
        %v1104 = vpack.c.b16 %v888, %v879
        %v1105 = vpack.c.b16 %v889, %v880
        %v1106 = vpack.c.b16 %v899, %v890
        %v1107 = vpack.c.b16 %v900, %v891
        %v1108 = vpack.c.b16 %v901, %v892
        %v1109 = vpack.c.b16 %v902, %v893
        %v1110 = vpack.c.b16 %v903, %v894
        %v1111 = vpack.c.b16 %v904, %v895
        %v1112 = vpack.c.b16 %v905, %v896
        %v1113 = vpack.c.b16 %v906, %v897
        %v1114 = vpack.c.b16 %v907, %v898
        %v1115 = vpack.c.b16 %v917, %v908
        %v1116 = vpack.c.b16 %v918, %v909
        %v1117 = vpack.c.b16 %v919, %v910
        %v1118 = vpack.c.b16 %v920, %v911
        %v1119 = vpack.c.b16 %v921, %v912
        %v1120 = vpack.c.b16 %v922, %v913
        %v1121 = vpack.c.b16 %v923, %v914
        %v1122 = vpack.c.b16 %v924, %v915
        %v1123 = vpack.c.b16 %v925, %v916
        %v1124 = vpack.c.b16 %v935, %v926
        %v1125 = vpack.c.b16 %v936, %v927
        %v1126 = vpack.c.b16 %v937, %v928
        %v1127 = vpack.c.b16 %v938, %v929
        %v1128 = vpack.c.b16 %v939, %v930
        %v1129 = vpack.c.b16 %v940, %v931
        %v1130 = vpack.c.b16 %v941, %v932
        %v1131 = vpack.c.b16 %v942, %v933
        %v1132 = vpack.c.b16 %v943, %v934
        %v1133 = vpack.c.b16 %v953, %v944
        %v1134 = vpack.c.b16 %v954, %v945
        %v1135 = vpack.c.b16 %v955, %v946
        %v1136 = vpack.c.b16 %v956, %v947
        %v1137 = vpack.c.b16 %v957, %v948
        %v1138 = vpack.c.b16 %v958, %v949
        %v1139 = vpack.c.b16 %v959, %v950
        %v1140 = vpack.c.b16 %v960, %v951
        %v1141 = vpack.c.b16 %v961, %v952
        %v1142 = vpack.c.b16 %v971, %v962
        %v1143 = vpack.c.b16 %v972, %v963
        %v1144 = vpack.c.b16 %v973, %v964
        %v1145 = vpack.c.b16 %v974, %v965
        %v1146 = vpack.c.b16 %v975, %v966
        %v1147 = vpack.c.b16 %v976, %v967
        %v1148 = vpack.c.b16 %v977, %v968
        %v1149 = vpack.c.b16 %v978, %v969
        %v1150 = vpack.c.b16 %v979, %v970
        %v1151 = vpack.c.b16 %v989, %v980
        %v1152 = vpack.c.b16 %v990, %v981
        %v1153 = vpack.c.b16 %v991, %v982
        %v1154 = vpack.c.b16 %v992, %v983
        %v1155 = vpack.c.b16 %v993, %v984
        %v1156 = vpack.c.b16 %v994, %v985
        %v1157 = vpack.c.b16 %v995, %v986
        %v1158 = vpack.c.b16 %v996, %v987
        %v1159 = vpack.c.b16 %v997, %v988
        %v1160 = vpack.c.b16 %v1007, %v998
        %v1161 = vpack.c.b16 %v1008, %v999
        %v1162 = vpack.c.b16 %v1009, %v1000
        %v1163 = vpack.c.b16 %v1010, %v1001
        %v1164 = vpack.c.b16 %v1011, %v1002
        %v1165 = vpack.c.b16 %v1012, %v1003
        %v1166 = vpack.c.b16 %v1013, %v1004
        %v1167 = vpack.c.b16 %v1014, %v1005
        %v1168 = vpack.c.b16 %v1015, %v1006
        %v1169 = vpack.c.b16 %v1025, %v1016
        %v1170 = vpack.c.b16 %v1026, %v1017
        %v1171 = vpack.c.b16 %v1027, %v1018
        %v1172 = vpack.c.b16 %v1028, %v1019
        %v1173 = vpack.c.b16 %v1029, %v1020
        %v1174 = vpack.c.b16 %v1030, %v1021
        %v1175 = vpack.c.b16 %v1031, %v1022
        %v1176 = vpack.c.b16 %v1032, %v1023
        %v1177 = vpack.c.b16 %v1033, %v1024
        %v1466 = vunpack.c.l.b16 %v438
        %v1467 = vunpack.c.l.b16 %v439
        %v1468 = vunpack.c.l.b16 %v440
        %v1469 = vunpack.c.l.b16 %v441
        %v1470 = vunpack.c.l.b16 %v442
        %v1471 = vunpack.c.l.b16 %v443
        %v1472 = vunpack.c.l.b16 %v444
        %v1473 = vunpack.c.l.b16 %v445
        %v1474 = vunpack.c.l.b16 %v446
        %v1475 = vunpack.c.l.b16 %v447
        %v1476 = vunpack.c.l.b16 %v448
        %v1477 = vunpack.c.l.b16 %v449
        %v1478 = vunpack.c.l.b16 %v450
        %v1479 = vunpack.c.l.b16 %v451
        %v1480 = vunpack.c.l.b16 %v452
        %v1481 = vunpack.c.l.b16 %v453
        %v1482 = vunpack.c.l.b16 %v454
        %v1483 = vunpack.c.l.b16 %v455
        %v1484 = vunpack.c.l.b16 %v456
        %v1485 = vunpack.c.l.b16 %v457
        %v1486 = vunpack.c.l.b16 %v458
        %v1487 = vunpack.c.l.b16 %v459
        %v1488 = vunpack.c.l.b16 %v460
        %v1489 = vunpack.c.l.b16 %v461
        %v1490 = vunpack.c.l.b16 %v462
        %v1491 = vunpack.c.l.b16 %v463
        %v1492 = vunpack.c.l.b16 %v464
        %v1493 = vunpack.c.l.b16 %v465
        %v1494 = vunpack.c.l.b16 %v466
        %v1495 = vunpack.c.l.b16 %v467
        %v1496 = vunpack.c.l.b16 %v468
        %v1497 = vunpack.c.l.b16 %v469
        %v1498 = vunpack.c.l.b16 %v470
        %v1499 = vunpack.c.l.b16 %v471
        %v1500 = vunpack.c.l.b16 %v472
        %v1501 = vunpack.c.l.b16 %v473
        %v1502 = vunpack.c.l.b16 %v474
        %v1503 = vunpack.c.l.b16 %v475
        %v1504 = vunpack.c.l.b16 %v476
        %v1505 = vunpack.c.l.b16 %v477
        %v1506 = vunpack.c.l.b16 %v478
        %v1507 = vunpack.c.l.b16 %v479
        %v1508 = vunpack.c.l.b16 %v480
        %v1509 = vunpack.c.l.b16 %v481
        %v1510 = vunpack.c.l.b16 %v482
        %v1511 = vunpack.c.l.b16 %v483
        %v1512 = vunpack.c.l.b16 %v484
        %v1513 = vunpack.c.l.b16 %v485
        %v1514 = vunpack.c.l.b16 %v486
        %v1515 = vunpack.c.l.b16 %v487
        %v1516 = vunpack.c.l.b16 %v488
        %v1517 = vunpack.c.l.b16 %v489
        %v1518 = vunpack.c.l.b16 %v490
        %v1519 = vunpack.c.l.b16 %v491
        %v1520 = vunpack.c.l.b16 %v492
        %v1521 = vunpack.c.l.b16 %v493
        %v1522 = vunpack.c.l.b16 %v494
        %v1523 = vunpack.c.l.b16 %v495
        %v1524 = vunpack.c.l.b16 %v496
        %v1525 = vunpack.c.l.b16 %v497
        %v1526 = vunpack.c.l.b16 %v498
        %v1527 = vunpack.c.l.b16 %v499
        %v1528 = vunpack.c.l.b16 %v500
        %v1529 = vunpack.c.l.b16 %v501
        %v1530 = vunpack.c.l.b16 %v502
        %v1531 = vunpack.c.l.b16 %v503
        %v1532 = vunpack.c.l.b16 %v504
        %v1533 = vunpack.c.l.b16 %v505
        %v1534 = vunpack.c.l.b16 %v506
        %v1535 = vunpack.c.l.b16 %v507
        %v1536 = vunpack.c.l.b16 %v508
        %v1537 = vunpack.c.l.b16 %v509
        %v1538 = vunpack.c.l.b16 %v510
        %v1539 = vunpack.c.l.b16 %v511
        %v1540 = vunpack.c.l.b16 %v512
        %v1541 = vunpack.c.l.b16 %v513
        %v1542 = vunpack.c.l.b16 %v514
        %v1543 = vunpack.c.l.b16 %v515
        %v1544 = vunpack.c.l.b16 %v516
        %v1545 = vunpack.c.l.b16 %v517
        %v1546 = vunpack.c.l.b16 %v518
        %v1547 = vunpack.c.l.b16 %v519
        %v1548 = vunpack.c.l.b16 %v520
        %v1549 = vunpack.c.l.b16 %v521
        %v1550 = vunpack.c.l.b16 %v522
        %v1551 = vunpack.c.l.b16 %v523
        %v1552 = vunpack.c.l.b16 %v524
        %v1553 = vunpack.c.l.b16 %v525
        %v1554 = vunpack.c.l.b16 %v526
        %v1555 = vunpack.c.l.b16 %v527
        %v1556 = vunpack.c.l.b16 %v528
        %v1557 = vunpack.c.l.b16 %v529
        %v1558 = vunpack.c.l.b16 %v530
        %v1559 = vunpack.c.l.b16 %v531
        %v1560 = vunpack.c.l.b16 %v532
        %v1561 = vunpack.c.l.b16 %v533
        %v1562 = vunpack.c.l.b16 %v534
        %v1563 = vunpack.c.l.b16 %v535
        %v1564 = vunpack.c.l.b16 %v536
        %v1565 = vunpack.c.l.b16 %v537
        %v1566 = vunpack.c.l.b16 %v538
        %v1567 = vunpack.c.l.b16 %v539
        %v1568 = vunpack.c.l.b16 %v540
        %v1569 = vunpack.c.l.b16 %v541
        %v1570 = vunpack.c.l.b16 %v542
        %v1571 = vunpack.c.l.b16 %v543
        %v1572 = vunpack.c.l.b16 %v544
        %v1573 = vunpack.c.l.b16 %v545
        %v1574 = vunpack.c.l.b16 %v546
        %v1575 = vunpack.c.l.b16 %v547
        %v1576 = vunpack.c.l.b16 %v548
        %v1577 = vunpack.c.l.b16 %v549
        %v1578 = vunpack.c.l.b16 %v550
        %v1579 = vunpack.c.l.b16 %v551
        %v1580 = vunpack.c.l.b16 %v552
        %v1581 = vunpack.c.l.b16 %v553
        %v1582 = vunpack.c.l.b16 %v554
        %v1583 = vunpack.c.l.b16 %v555
        %v1584 = vunpack.c.l.b16 %v556
        %v1585 = vunpack.c.l.b16 %v557
        %v1586 = vunpack.c.l.b16 %v558
        %v1587 = vunpack.c.l.b16 %v559
        %v1588 = vunpack.c.l.b16 %v560
        %v1589 = vunpack.c.l.b16 %v561
        %v1590 = vunpack.c.l.b16 %v562
        %v1591 = vunpack.c.l.b16 %v563
        %v1592 = vunpack.c.l.b16 %v564
        %v1593 = vunpack.c.l.b16 %v565
        %v1594 = vunpack.c.l.b16 %v566
        %v1595 = vunpack.c.l.b16 %v567
        %v1596 = vunpack.c.l.b16 %v568
        %v1597 = vunpack.c.l.b16 %v569
        %v1598 = vunpack.c.l.b16 %v570
        %v1599 = vunpack.c.l.b16 %v571
        %v1600 = vunpack.c.l.b16 %v572
        %v1601 = vunpack.c.l.b16 %v573
        %v1602 = vunpack.c.l.b16 %v574
        %v1603 = vunpack.c.l.b16 %v575
        %v1604 = vunpack.c.l.b16 %v576
        %v1605 = vunpack.c.l.b16 %v577
        %v1606 = vunpack.c.l.b16 %v578
        %v1607 = vunpack.c.l.b16 %v579
        %v1608 = vunpack.c.l.b16 %v580
        %v1609 = vunpack.c.l.b16 %v581
        %v1610 = vpack.c.b16 %v1467, %v1466
        %v1611 = vpack.c.b16 %v1469, %v1468
        %v1612 = vpack.c.b16 %v1471, %v1470
        %v1613 = vpack.c.b16 %v1473, %v1472
        %v1614 = vpack.c.b16 %v1475, %v1474
        %v1615 = vpack.c.b16 %v1477, %v1476
        %v1616 = vpack.c.b16 %v1479, %v1478
        %v1617 = vpack.c.b16 %v1481, %v1480
        %v1618 = vpack.c.b16 %v1483, %v1482
        %v1619 = vpack.c.b16 %v1485, %v1484
        %v1620 = vpack.c.b16 %v1487, %v1486
        %v1621 = vpack.c.b16 %v1489, %v1488
        %v1622 = vpack.c.b16 %v1491, %v1490
        %v1623 = vpack.c.b16 %v1493, %v1492
        %v1624 = vpack.c.b16 %v1495, %v1494
        %v1625 = vpack.c.b16 %v1497, %v1496
        %v1626 = vpack.c.b16 %v1499, %v1498
        %v1627 = vpack.c.b16 %v1501, %v1500
        %v1628 = vpack.c.b16 %v1503, %v1502
        %v1629 = vpack.c.b16 %v1505, %v1504
        %v1630 = vpack.c.b16 %v1507, %v1506
        %v1631 = vpack.c.b16 %v1509, %v1508
        %v1632 = vpack.c.b16 %v1511, %v1510
        %v1633 = vpack.c.b16 %v1513, %v1512
        %v1634 = vpack.c.b16 %v1515, %v1514
        %v1635 = vpack.c.b16 %v1517, %v1516
        %v1636 = vpack.c.b16 %v1519, %v1518
        %v1637 = vpack.c.b16 %v1521, %v1520
        %v1638 = vpack.c.b16 %v1523, %v1522
        %v1639 = vpack.c.b16 %v1525, %v1524
        %v1640 = vpack.c.b16 %v1527, %v1526
        %v1641 = vpack.c.b16 %v1529, %v1528
        %v1642 = vpack.c.b16 %v1531, %v1530
        %v1643 = vpack.c.b16 %v1533, %v1532
        %v1644 = vpack.c.b16 %v1535, %v1534
        %v1645 = vpack.c.b16 %v1537, %v1536
        %v1646 = vpack.c.b16 %v1539, %v1538
        %v1647 = vpack.c.b16 %v1541, %v1540
        %v1648 = vpack.c.b16 %v1543, %v1542
        %v1649 = vpack.c.b16 %v1545, %v1544
        %v1650 = vpack.c.b16 %v1547, %v1546
        %v1651 = vpack.c.b16 %v1549, %v1548
        %v1652 = vpack.c.b16 %v1551, %v1550
        %v1653 = vpack.c.b16 %v1553, %v1552
        %v1654 = vpack.c.b16 %v1555, %v1554
        %v1655 = vpack.c.b16 %v1557, %v1556
        %v1656 = vpack.c.b16 %v1559, %v1558
        %v1657 = vpack.c.b16 %v1561, %v1560
        %v1658 = vpack.c.b16 %v1563, %v1562
        %v1659 = vpack.c.b16 %v1565, %v1564
        %v1660 = vpack.c.b16 %v1567, %v1566
        %v1661 = vpack.c.b16 %v1569, %v1568
        %v1662 = vpack.c.b16 %v1571, %v1570
        %v1663 = vpack.c.b16 %v1573, %v1572
        %v1664 = vpack.c.b16 %v1575, %v1574
        %v1665 = vpack.c.b16 %v1577, %v1576
        %v1666 = vpack.c.b16 %v1579, %v1578
        %v1667 = vpack.c.b16 %v1581, %v1580
        %v1668 = vpack.c.b16 %v1583, %v1582
        %v1669 = vpack.c.b16 %v1585, %v1584
        %v1670 = vpack.c.b16 %v1587, %v1586
        %v1671 = vpack.c.b16 %v1589, %v1588
        %v1672 = vpack.c.b16 %v1591, %v1590
        %v1673 = vpack.c.b16 %v1593, %v1592
        %v1674 = vpack.c.b16 %v1595, %v1594
        %v1675 = vpack.c.b16 %v1597, %v1596
        %v1676 = vpack.c.b16 %v1599, %v1598
        %v1677 = vpack.c.b16 %v1601, %v1600
        %v1678 = vpack.c.b16 %v1603, %v1602
        %v1679 = vpack.c.b16 %v1605, %v1604
        %v1680 = vpack.c.b16 %v1607, %v1606
        %v1681 = vpack.c.b16 %v1609, %v1608
        %1754 = vmatpush.bf16.msra.mxu0 %v1617
        %1755 = vmatpush.bf16.msra.mxu0 %v1616
        %1756 = vmatpush.bf16.msra.mxu0 %v1615
        %1757 = vmatpush.bf16.msra.mxu0 %v1614
        %1758 = vmatpush.bf16.msra.mxu0 %v1613
        %1759 = vmatpush.bf16.msra.mxu0 %v1612
        %1760 = vmatpush.bf16.msra.mxu0 %v1611
        %1761 = vmatpush.bf16.msra.mxu0 %v1610
        %1762 = vmatmul.bf16.gmra.mxu0 %v1034
        %v1763 = vpop.f32.mrf.mxu0
        %v1764 = vadd.f32 %v584, %v1763
        %v1765 = vpop.f32.mrf.mxu0
        %v1766 = vadd.f32 %v584, %v1765
        %1767 = vmatmul.bf16.gmra.mxu0 %v1043
        %v1768 = vpop.f32.mrf.mxu0
        %v1769 = vadd.f32 %v584, %v1768
        %v1770 = vpop.f32.mrf.mxu0
        %v1771 = vadd.f32 %v584, %v1770
        %1772 = vmatmul.bf16.gmra.mxu0 %v1052
        %v1773 = vpop.f32.mrf.mxu0
        %v1774 = vadd.f32 %v584, %v1773
        %v1775 = vpop.f32.mrf.mxu0
        %v1776 = vadd.f32 %v584, %v1775
        %1777 = vmatmul.bf16.gmra.mxu0 %v1061
        %v1778 = vpop.f32.mrf.mxu0
        %v1779 = vadd.f32 %v584, %v1778
        %v1780 = vpop.f32.mrf.mxu0
        %v1781 = vadd.f32 %v584, %v1780
        %1782 = vmatmul.bf16.gmra.mxu0 %v1070
        %v1783 = vpop.f32.mrf.mxu0
        %v1784 = vadd.f32 %v584, %v1783
        %v1785 = vpop.f32.mrf.mxu0
        %v1786 = vadd.f32 %v584, %v1785
        %1787 = vmatmul.bf16.gmra.mxu0 %v1079
        %v1788 = vpop.f32.mrf.mxu0
        %v1789 = vadd.f32 %v584, %v1788
        %v1790 = vpop.f32.mrf.mxu0
        %v1791 = vadd.f32 %v584, %v1790
        %1792 = vmatmul.bf16.gmra.mxu0 %v1088
        %v1793 = vpop.f32.mrf.mxu0
        %v1794 = vadd.f32 %v584, %v1793
        %v1795 = vpop.f32.mrf.mxu0
        %v1796 = vadd.f32 %v584, %v1795
        %1797 = vmatmul.bf16.gmra.mxu0 %v1097
        %v1798 = vpop.f32.mrf.mxu0
        %v1799 = vadd.f32 %v584, %v1798
        %v1800 = vpop.f32.mrf.mxu0
        %v1801 = vadd.f32 %v584, %v1800
        %1802 = vmatmul.bf16.gmra.mxu0 %v1106
        %v1803 = vpop.f32.mrf.mxu0
        %v1804 = vadd.f32 %v584, %v1803
        %v1805 = vpop.f32.mrf.mxu0
        %v1806 = vadd.f32 %v584, %v1805
        %1807 = vmatmul.bf16.gmra.mxu0 %v1115
        %v1808 = vpop.f32.mrf.mxu0
        %v1809 = vadd.f32 %v584, %v1808
        %v1810 = vpop.f32.mrf.mxu0
        %v1811 = vadd.f32 %v584, %v1810
        %1812 = vmatmul.bf16.gmra.mxu0 %v1124
        %v1813 = vpop.f32.mrf.mxu0
        %v1814 = vadd.f32 %v584, %v1813
        %v1815 = vpop.f32.mrf.mxu0
        %v1816 = vadd.f32 %v584, %v1815
        %1817 = vmatmul.bf16.gmra.mxu0 %v1133
        %v1818 = vpop.f32.mrf.mxu0
        %v1819 = vadd.f32 %v584, %v1818
        %v1820 = vpop.f32.mrf.mxu0
        %v1821 = vadd.f32 %v584, %v1820
        %1822 = vmatmul.bf16.gmra.mxu0 %v1142
        %v1823 = vpop.f32.mrf.mxu0
        %v1824 = vadd.f32 %v584, %v1823
        %v1825 = vpop.f32.mrf.mxu0
        %v1826 = vadd.f32 %v584, %v1825
        %1827 = vmatmul.bf16.gmra.mxu0 %v1151
        %v1828 = vpop.f32.mrf.mxu0
        %v1829 = vadd.f32 %v584, %v1828
        %v1830 = vpop.f32.mrf.mxu0
        %v1831 = vadd.f32 %v584, %v1830
        %1832 = vmatmul.bf16.gmra.mxu0 %v1160
        %v1833 = vpop.f32.mrf.mxu0
        %v1834 = vadd.f32 %v584, %v1833
        %v1835 = vpop.f32.mrf.mxu0
        %v1836 = vadd.f32 %v584, %v1835
        %1837 = vmatmul.bf16.gmra.mxu0 %v1169
        %v1838 = vpop.f32.mrf.mxu0
        %v1839 = vadd.f32 %v584, %v1838
        %v1840 = vpop.f32.mrf.mxu0
        %v1841 = vadd.f32 %v584, %v1840
        %1842 = vdwg.mxu0
        %1843 = vmatpush.bf16.msra.mxu0 %v1625
        %1844 = vmatpush.bf16.msra.mxu0 %v1624
        %1845 = vmatpush.bf16.msra.mxu0 %v1623
        %1846 = vmatpush.bf16.msra.mxu0 %v1622
        %1847 = vmatpush.bf16.msra.mxu0 %v1621
        %1848 = vmatpush.bf16.msra.mxu0 %v1620
        %1849 = vmatpush.bf16.msra.mxu0 %v1619
        %1850 = vmatpush.bf16.msra.mxu0 %v1618
        %1851 = vmatmul.bf16.gmra.mxu0 %v1035
        %v1852 = vpop.f32.mrf.mxu0
        %v1853 = vadd.f32 %v1764, %v1852
        %v1854 = vpop.f32.mrf.mxu0
        %v1855 = vadd.f32 %v1766, %v1854
        %1856 = vmatmul.bf16.gmra.mxu0 %v1044
        %v1857 = vpop.f32.mrf.mxu0
        %v1858 = vadd.f32 %v1769, %v1857
        %v1859 = vpop.f32.mrf.mxu0
        %v1860 = vadd.f32 %v1771, %v1859
        %1861 = vmatmul.bf16.gmra.mxu0 %v1053
        %v1862 = vpop.f32.mrf.mxu0
        %v1863 = vadd.f32 %v1774, %v1862
        %v1864 = vpop.f32.mrf.mxu0
        %v1865 = vadd.f32 %v1776, %v1864
        %1866 = vmatmul.bf16.gmra.mxu0 %v1062
        %v1867 = vpop.f32.mrf.mxu0
        %v1868 = vadd.f32 %v1779, %v1867
        %v1869 = vpop.f32.mrf.mxu0
        %v1870 = vadd.f32 %v1781, %v1869
        %1871 = vmatmul.bf16.gmra.mxu0 %v1071
        %v1872 = vpop.f32.mrf.mxu0
        %v1873 = vadd.f32 %v1784, %v1872
        %v1874 = vpop.f32.mrf.mxu0
        %v1875 = vadd.f32 %v1786, %v1874
        %1876 = vmatmul.bf16.gmra.mxu0 %v1080
        %v1877 = vpop.f32.mrf.mxu0
        %v1878 = vadd.f32 %v1789, %v1877
        %v1879 = vpop.f32.mrf.mxu0
        %v1880 = vadd.f32 %v1791, %v1879
        %1881 = vmatmul.bf16.gmra.mxu0 %v1089
        %v1882 = vpop.f32.mrf.mxu0
        %v1883 = vadd.f32 %v1794, %v1882
        %v1884 = vpop.f32.mrf.mxu0
        %v1885 = vadd.f32 %v1796, %v1884
        %1886 = vmatmul.bf16.gmra.mxu0 %v1098
        %v1887 = vpop.f32.mrf.mxu0
        %v1888 = vadd.f32 %v1799, %v1887
        %v1889 = vpop.f32.mrf.mxu0
        %v1890 = vadd.f32 %v1801, %v1889
        %1891 = vmatmul.bf16.gmra.mxu0 %v1107
        %v1892 = vpop.f32.mrf.mxu0
        %v1893 = vadd.f32 %v1804, %v1892
        %v1894 = vpop.f32.mrf.mxu0
        %v1895 = vadd.f32 %v1806, %v1894
        %1896 = vmatmul.bf16.gmra.mxu0 %v1116
        %v1897 = vpop.f32.mrf.mxu0
        %v1898 = vadd.f32 %v1809, %v1897
        %v1899 = vpop.f32.mrf.mxu0
        %v1900 = vadd.f32 %v1811, %v1899
        %1901 = vmatmul.bf16.gmra.mxu0 %v1125
        %v1902 = vpop.f32.mrf.mxu0
        %v1903 = vadd.f32 %v1814, %v1902
        %v1904 = vpop.f32.mrf.mxu0
        %v1905 = vadd.f32 %v1816, %v1904
        %1906 = vmatmul.bf16.gmra.mxu0 %v1134
        %v1907 = vpop.f32.mrf.mxu0
        %v1908 = vadd.f32 %v1819, %v1907
        %v1909 = vpop.f32.mrf.mxu0
        %v1910 = vadd.f32 %v1821, %v1909
        %1911 = vmatmul.bf16.gmra.mxu0 %v1143
        %v1912 = vpop.f32.mrf.mxu0
        %v1913 = vadd.f32 %v1824, %v1912
        %v1914 = vpop.f32.mrf.mxu0
        %v1915 = vadd.f32 %v1826, %v1914
        %1916 = vmatmul.bf16.gmra.mxu0 %v1152
        %v1917 = vpop.f32.mrf.mxu0
        %v1918 = vadd.f32 %v1829, %v1917
        %v1919 = vpop.f32.mrf.mxu0
        %v1920 = vadd.f32 %v1831, %v1919
        %1921 = vmatmul.bf16.gmra.mxu0 %v1161
        %v1922 = vpop.f32.mrf.mxu0
        %v1923 = vadd.f32 %v1834, %v1922
        %v1924 = vpop.f32.mrf.mxu0
        %v1925 = vadd.f32 %v1836, %v1924
        %1926 = vmatmul.bf16.gmra.mxu0 %v1170
        %v1927 = vpop.f32.mrf.mxu0
        %v1928 = vadd.f32 %v1839, %v1927
        %v1929 = vpop.f32.mrf.mxu0
        %v1930 = vadd.f32 %v1841, %v1929
        %1931 = vdwg.mxu0
        %1932 = vmatpush.bf16.msra.mxu0 %v1633
        %1933 = vmatpush.bf16.msra.mxu0 %v1632
        %1934 = vmatpush.bf16.msra.mxu0 %v1631
        %1935 = vmatpush.bf16.msra.mxu0 %v1630
        %1936 = vmatpush.bf16.msra.mxu0 %v1629
        %1937 = vmatpush.bf16.msra.mxu0 %v1628
        %1938 = vmatpush.bf16.msra.mxu0 %v1627
        %1939 = vmatpush.bf16.msra.mxu0 %v1626
        %1940 = vmatmul.bf16.gmra.mxu0 %v1036
        %v1941 = vpop.f32.mrf.mxu0
        %v1942 = vadd.f32 %v1853, %v1941
        %v1943 = vpop.f32.mrf.mxu0
        %v1944 = vadd.f32 %v1855, %v1943
        %1945 = vmatmul.bf16.gmra.mxu0 %v1045
        %v1946 = vpop.f32.mrf.mxu0
        %v1947 = vadd.f32 %v1858, %v1946
        %v1948 = vpop.f32.mrf.mxu0
        %v1949 = vadd.f32 %v1860, %v1948
        %1950 = vmatmul.bf16.gmra.mxu0 %v1054
        %v1951 = vpop.f32.mrf.mxu0
        %v1952 = vadd.f32 %v1863, %v1951
        %v1953 = vpop.f32.mrf.mxu0
        %v1954 = vadd.f32 %v1865, %v1953
        %1955 = vmatmul.bf16.gmra.mxu0 %v1063
        %v1956 = vpop.f32.mrf.mxu0
        %v1957 = vadd.f32 %v1868, %v1956
        %v1958 = vpop.f32.mrf.mxu0
        %v1959 = vadd.f32 %v1870, %v1958
        %1960 = vmatmul.bf16.gmra.mxu0 %v1072
        %v1961 = vpop.f32.mrf.mxu0
        %v1962 = vadd.f32 %v1873, %v1961
        %v1963 = vpop.f32.mrf.mxu0
        %v1964 = vadd.f32 %v1875, %v1963
        %1965 = vmatmul.bf16.gmra.mxu0 %v1081
        %v1966 = vpop.f32.mrf.mxu0
        %v1967 = vadd.f32 %v1878, %v1966
        %v1968 = vpop.f32.mrf.mxu0
        %v1969 = vadd.f32 %v1880, %v1968
        %1970 = vmatmul.bf16.gmra.mxu0 %v1090
        %v1971 = vpop.f32.mrf.mxu0
        %v1972 = vadd.f32 %v1883, %v1971
        %v1973 = vpop.f32.mrf.mxu0
        %v1974 = vadd.f32 %v1885, %v1973
        %1975 = vmatmul.bf16.gmra.mxu0 %v1099
        %v1976 = vpop.f32.mrf.mxu0
        %v1977 = vadd.f32 %v1888, %v1976
        %v1978 = vpop.f32.mrf.mxu0
        %v1979 = vadd.f32 %v1890, %v1978
        %1980 = vmatmul.bf16.gmra.mxu0 %v1108
        %v1981 = vpop.f32.mrf.mxu0
        %v1982 = vadd.f32 %v1893, %v1981
        %v1983 = vpop.f32.mrf.mxu0
        %v1984 = vadd.f32 %v1895, %v1983
        %1985 = vmatmul.bf16.gmra.mxu0 %v1117
        %v1986 = vpop.f32.mrf.mxu0
        %v1987 = vadd.f32 %v1898, %v1986
        %v1988 = vpop.f32.mrf.mxu0
        %v1989 = vadd.f32 %v1900, %v1988
        %1990 = vmatmul.bf16.gmra.mxu0 %v1126
        %v1991 = vpop.f32.mrf.mxu0
        %v1992 = vadd.f32 %v1903, %v1991
        %v1993 = vpop.f32.mrf.mxu0
        %v1994 = vadd.f32 %v1905, %v1993
        %1995 = vmatmul.bf16.gmra.mxu0 %v1135
        %v1996 = vpop.f32.mrf.mxu0
        %v1997 = vadd.f32 %v1908, %v1996
        %v1998 = vpop.f32.mrf.mxu0
        %v1999 = vadd.f32 %v1910, %v1998
        %2000 = vmatmul.bf16.gmra.mxu0 %v1144
        %v2001 = vpop.f32.mrf.mxu0
        %v2002 = vadd.f32 %v1913, %v2001
        %v2003 = vpop.f32.mrf.mxu0
        %v2004 = vadd.f32 %v1915, %v2003
        %2005 = vmatmul.bf16.gmra.mxu0 %v1153
        %v2006 = vpop.f32.mrf.mxu0
        %v2007 = vadd.f32 %v1918, %v2006
        %v2008 = vpop.f32.mrf.mxu0
        %v2009 = vadd.f32 %v1920, %v2008
        %2010 = vmatmul.bf16.gmra.mxu0 %v1162
        %v2011 = vpop.f32.mrf.mxu0
        %v2012 = vadd.f32 %v1923, %v2011
        %v2013 = vpop.f32.mrf.mxu0
        %v2014 = vadd.f32 %v1925, %v2013
        %2015 = vmatmul.bf16.gmra.mxu0 %v1171
        %v2016 = vpop.f32.mrf.mxu0
        %v2017 = vadd.f32 %v1928, %v2016
        %v2018 = vpop.f32.mrf.mxu0
        %v2019 = vadd.f32 %v1930, %v2018
        %2020 = vdwg.mxu0
        %2021 = vmatpush.bf16.msra.mxu0 %v1641
        %2022 = vmatpush.bf16.msra.mxu0 %v1640
        %2023 = vmatpush.bf16.msra.mxu0 %v1639
        %2024 = vmatpush.bf16.msra.mxu0 %v1638
        %2025 = vmatpush.bf16.msra.mxu0 %v1637
        %2026 = vmatpush.bf16.msra.mxu0 %v1636
        %2027 = vmatpush.bf16.msra.mxu0 %v1635
        %2028 = vmatpush.bf16.msra.mxu0 %v1634
        %2029 = vmatmul.bf16.gmra.mxu0 %v1037
        %v2030 = vpop.f32.mrf.mxu0
        %v2031 = vadd.f32 %v1942, %v2030
        %v2032 = vpop.f32.mrf.mxu0
        %v2033 = vadd.f32 %v1944, %v2032
        %2034 = vmatmul.bf16.gmra.mxu0 %v1046
        %v2035 = vpop.f32.mrf.mxu0
        %v2036 = vadd.f32 %v1947, %v2035
        %v2037 = vpop.f32.mrf.mxu0
        %v2038 = vadd.f32 %v1949, %v2037
        %2039 = vmatmul.bf16.gmra.mxu0 %v1055
        %v2040 = vpop.f32.mrf.mxu0
        %v2041 = vadd.f32 %v1952, %v2040
        %v2042 = vpop.f32.mrf.mxu0
        %v2043 = vadd.f32 %v1954, %v2042
        %2044 = vmatmul.bf16.gmra.mxu0 %v1064
        %v2045 = vpop.f32.mrf.mxu0
        %v2046 = vadd.f32 %v1957, %v2045
        %v2047 = vpop.f32.mrf.mxu0
        %v2048 = vadd.f32 %v1959, %v2047
        %2049 = vmatmul.bf16.gmra.mxu0 %v1073
        %v2050 = vpop.f32.mrf.mxu0
        %v2051 = vadd.f32 %v1962, %v2050
        %v2052 = vpop.f32.mrf.mxu0
        %v2053 = vadd.f32 %v1964, %v2052
        %2054 = vmatmul.bf16.gmra.mxu0 %v1082
        %v2055 = vpop.f32.mrf.mxu0
        %v2056 = vadd.f32 %v1967, %v2055
        %v2057 = vpop.f32.mrf.mxu0
        %v2058 = vadd.f32 %v1969, %v2057
        %2059 = vmatmul.bf16.gmra.mxu0 %v1091
        %v2060 = vpop.f32.mrf.mxu0
        %v2061 = vadd.f32 %v1972, %v2060
        %v2062 = vpop.f32.mrf.mxu0
        %v2063 = vadd.f32 %v1974, %v2062
        %2064 = vmatmul.bf16.gmra.mxu0 %v1100
        %v2065 = vpop.f32.mrf.mxu0
        %v2066 = vadd.f32 %v1977, %v2065
        %v2067 = vpop.f32.mrf.mxu0
        %v2068 = vadd.f32 %v1979, %v2067
        %2069 = vmatmul.bf16.gmra.mxu0 %v1109
        %v2070 = vpop.f32.mrf.mxu0
        %v2071 = vadd.f32 %v1982, %v2070
        %v2072 = vpop.f32.mrf.mxu0
        %v2073 = vadd.f32 %v1984, %v2072
        %2074 = vmatmul.bf16.gmra.mxu0 %v1118
        %v2075 = vpop.f32.mrf.mxu0
        %v2076 = vadd.f32 %v1987, %v2075
        %v2077 = vpop.f32.mrf.mxu0
        %v2078 = vadd.f32 %v1989, %v2077
        %2079 = vmatmul.bf16.gmra.mxu0 %v1127
        %v2080 = vpop.f32.mrf.mxu0
        %v2081 = vadd.f32 %v1992, %v2080
        %v2082 = vpop.f32.mrf.mxu0
        %v2083 = vadd.f32 %v1994, %v2082
        %2084 = vmatmul.bf16.gmra.mxu0 %v1136
        %v2085 = vpop.f32.mrf.mxu0
        %v2086 = vadd.f32 %v1997, %v2085
        %v2087 = vpop.f32.mrf.mxu0
        %v2088 = vadd.f32 %v1999, %v2087
        %2089 = vmatmul.bf16.gmra.mxu0 %v1145
        %v2090 = vpop.f32.mrf.mxu0
        %v2091 = vadd.f32 %v2002, %v2090
        %v2092 = vpop.f32.mrf.mxu0
        %v2093 = vadd.f32 %v2004, %v2092
        %2094 = vmatmul.bf16.gmra.mxu0 %v1154
        %v2095 = vpop.f32.mrf.mxu0
        %v2096 = vadd.f32 %v2007, %v2095
        %v2097 = vpop.f32.mrf.mxu0
        %v2098 = vadd.f32 %v2009, %v2097
        %2099 = vmatmul.bf16.gmra.mxu0 %v1163
        %v2100 = vpop.f32.mrf.mxu0
        %v2101 = vadd.f32 %v2012, %v2100
        %v2102 = vpop.f32.mrf.mxu0
        %v2103 = vadd.f32 %v2014, %v2102
        %2104 = vmatmul.bf16.gmra.mxu0 %v1172
        %v2105 = vpop.f32.mrf.mxu0
        %v2106 = vadd.f32 %v2017, %v2105
        %v2107 = vpop.f32.mrf.mxu0
        %v2108 = vadd.f32 %v2019, %v2107
        %2109 = vdwg.mxu0
        %2110 = vmatpush.bf16.msra.mxu0 %v1649
        %2111 = vmatpush.bf16.msra.mxu0 %v1648
        %2112 = vmatpush.bf16.msra.mxu0 %v1647
        %2113 = vmatpush.bf16.msra.mxu0 %v1646
        %2114 = vmatpush.bf16.msra.mxu0 %v1645
        %2115 = vmatpush.bf16.msra.mxu0 %v1644
        %2116 = vmatpush.bf16.msra.mxu0 %v1643
        %2117 = vmatpush.bf16.msra.mxu0 %v1642
        %2118 = vmatmul.bf16.gmra.mxu0 %v1038
        %v2119 = vpop.f32.mrf.mxu0
        %v2120 = vadd.f32 %v2031, %v2119
        %v2121 = vpop.f32.mrf.mxu0
        %v2122 = vadd.f32 %v2033, %v2121
        %2123 = vmatmul.bf16.gmra.mxu0 %v1047
        %v2124 = vpop.f32.mrf.mxu0
        %v2125 = vadd.f32 %v2036, %v2124
        %v2126 = vpop.f32.mrf.mxu0
        %v2127 = vadd.f32 %v2038, %v2126
        %2128 = vmatmul.bf16.gmra.mxu0 %v1056
        %v2129 = vpop.f32.mrf.mxu0
        %v2130 = vadd.f32 %v2041, %v2129
        %v2131 = vpop.f32.mrf.mxu0
        %v2132 = vadd.f32 %v2043, %v2131
        %2133 = vmatmul.bf16.gmra.mxu0 %v1065
        %v2134 = vpop.f32.mrf.mxu0
        %v2135 = vadd.f32 %v2046, %v2134
        %v2136 = vpop.f32.mrf.mxu0
        %v2137 = vadd.f32 %v2048, %v2136
        %2138 = vmatmul.bf16.gmra.mxu0 %v1074
        %v2139 = vpop.f32.mrf.mxu0
        %v2140 = vadd.f32 %v2051, %v2139
        %v2141 = vpop.f32.mrf.mxu0
        %v2142 = vadd.f32 %v2053, %v2141
        %2143 = vmatmul.bf16.gmra.mxu0 %v1083
        %v2144 = vpop.f32.mrf.mxu0
        %v2145 = vadd.f32 %v2056, %v2144
        %v2146 = vpop.f32.mrf.mxu0
        %v2147 = vadd.f32 %v2058, %v2146
        %2148 = vmatmul.bf16.gmra.mxu0 %v1092
        %v2149 = vpop.f32.mrf.mxu0
        %v2150 = vadd.f32 %v2061, %v2149
        %v2151 = vpop.f32.mrf.mxu0
        %v2152 = vadd.f32 %v2063, %v2151
        %2153 = vmatmul.bf16.gmra.mxu0 %v1101
        %v2154 = vpop.f32.mrf.mxu0
        %v2155 = vadd.f32 %v2066, %v2154
        %v2156 = vpop.f32.mrf.mxu0
        %v2157 = vadd.f32 %v2068, %v2156
        %2158 = vmatmul.bf16.gmra.mxu0 %v1110
        %v2159 = vpop.f32.mrf.mxu0
        %v2160 = vadd.f32 %v2071, %v2159
        %v2161 = vpop.f32.mrf.mxu0
        %v2162 = vadd.f32 %v2073, %v2161
        %2163 = vmatmul.bf16.gmra.mxu0 %v1119
        %v2164 = vpop.f32.mrf.mxu0
        %v2165 = vadd.f32 %v2076, %v2164
        %v2166 = vpop.f32.mrf.mxu0
        %v2167 = vadd.f32 %v2078, %v2166
        %2168 = vmatmul.bf16.gmra.mxu0 %v1128
        %v2169 = vpop.f32.mrf.mxu0
        %v2170 = vadd.f32 %v2081, %v2169
        %v2171 = vpop.f32.mrf.mxu0
        %v2172 = vadd.f32 %v2083, %v2171
        %2173 = vmatmul.bf16.gmra.mxu0 %v1137
        %v2174 = vpop.f32.mrf.mxu0
        %v2175 = vadd.f32 %v2086, %v2174
        %v2176 = vpop.f32.mrf.mxu0
        %v2177 = vadd.f32 %v2088, %v2176
        %2178 = vmatmul.bf16.gmra.mxu0 %v1146
        %v2179 = vpop.f32.mrf.mxu0
        %v2180 = vadd.f32 %v2091, %v2179
        %v2181 = vpop.f32.mrf.mxu0
        %v2182 = vadd.f32 %v2093, %v2181
        %2183 = vmatmul.bf16.gmra.mxu0 %v1155
        %v2184 = vpop.f32.mrf.mxu0
        %v2185 = vadd.f32 %v2096, %v2184
        %v2186 = vpop.f32.mrf.mxu0
        %v2187 = vadd.f32 %v2098, %v2186
        %2188 = vmatmul.bf16.gmra.mxu0 %v1164
        %v2189 = vpop.f32.mrf.mxu0
        %v2190 = vadd.f32 %v2101, %v2189
        %v2191 = vpop.f32.mrf.mxu0
        %v2192 = vadd.f32 %v2103, %v2191
        %2193 = vmatmul.bf16.gmra.mxu0 %v1173
        %v2194 = vpop.f32.mrf.mxu0
        %v2195 = vadd.f32 %v2106, %v2194
        %v2196 = vpop.f32.mrf.mxu0
        %v2197 = vadd.f32 %v2108, %v2196
        %2198 = vdwg.mxu0
        %2199 = vmatpush.bf16.msra.mxu0 %v1657
        %2200 = vmatpush.bf16.msra.mxu0 %v1656
        %2201 = vmatpush.bf16.msra.mxu0 %v1655
        %2202 = vmatpush.bf16.msra.mxu0 %v1654
        %2203 = vmatpush.bf16.msra.mxu0 %v1653
        %2204 = vmatpush.bf16.msra.mxu0 %v1652
        %2205 = vmatpush.bf16.msra.mxu0 %v1651
        %2206 = vmatpush.bf16.msra.mxu0 %v1650
        %2207 = vmatmul.bf16.gmra.mxu0 %v1039
        %v2208 = vpop.f32.mrf.mxu0
        %v2209 = vadd.f32 %v2120, %v2208
        %v2210 = vpop.f32.mrf.mxu0
        %v2211 = vadd.f32 %v2122, %v2210
        %2212 = vmatmul.bf16.gmra.mxu0 %v1048
        %v2213 = vpop.f32.mrf.mxu0
        %v2214 = vadd.f32 %v2125, %v2213
        %v2215 = vpop.f32.mrf.mxu0
        %v2216 = vadd.f32 %v2127, %v2215
        %2217 = vmatmul.bf16.gmra.mxu0 %v1057
        %v2218 = vpop.f32.mrf.mxu0
        %v2219 = vadd.f32 %v2130, %v2218
        %v2220 = vpop.f32.mrf.mxu0
        %v2221 = vadd.f32 %v2132, %v2220
        %2222 = vmatmul.bf16.gmra.mxu0 %v1066
        %v2223 = vpop.f32.mrf.mxu0
        %v2224 = vadd.f32 %v2135, %v2223
        %v2225 = vpop.f32.mrf.mxu0
        %v2226 = vadd.f32 %v2137, %v2225
        %2227 = vmatmul.bf16.gmra.mxu0 %v1075
        %v2228 = vpop.f32.mrf.mxu0
        %v2229 = vadd.f32 %v2140, %v2228
        %v2230 = vpop.f32.mrf.mxu0
        %v2231 = vadd.f32 %v2142, %v2230
        %2232 = vmatmul.bf16.gmra.mxu0 %v1084
        %v2233 = vpop.f32.mrf.mxu0
        %v2234 = vadd.f32 %v2145, %v2233
        %v2235 = vpop.f32.mrf.mxu0
        %v2236 = vadd.f32 %v2147, %v2235
        %2237 = vmatmul.bf16.gmra.mxu0 %v1093
        %v2238 = vpop.f32.mrf.mxu0
        %v2239 = vadd.f32 %v2150, %v2238
        %v2240 = vpop.f32.mrf.mxu0
        %v2241 = vadd.f32 %v2152, %v2240
        %2242 = vmatmul.bf16.gmra.mxu0 %v1102
        %v2243 = vpop.f32.mrf.mxu0
        %v2244 = vadd.f32 %v2155, %v2243
        %v2245 = vpop.f32.mrf.mxu0
        %v2246 = vadd.f32 %v2157, %v2245
        %2247 = vmatmul.bf16.gmra.mxu0 %v1111
        %v2248 = vpop.f32.mrf.mxu0
        %v2249 = vadd.f32 %v2160, %v2248
        %v2250 = vpop.f32.mrf.mxu0
        %v2251 = vadd.f32 %v2162, %v2250
        %2252 = vmatmul.bf16.gmra.mxu0 %v1120
        %v2253 = vpop.f32.mrf.mxu0
        %v2254 = vadd.f32 %v2165, %v2253
        %v2255 = vpop.f32.mrf.mxu0
        %v2256 = vadd.f32 %v2167, %v2255
        %2257 = vmatmul.bf16.gmra.mxu0 %v1129
        %v2258 = vpop.f32.mrf.mxu0
        %v2259 = vadd.f32 %v2170, %v2258
        %v2260 = vpop.f32.mrf.mxu0
        %v2261 = vadd.f32 %v2172, %v2260
        %2262 = vmatmul.bf16.gmra.mxu0 %v1138
        %v2263 = vpop.f32.mrf.mxu0
        %v2264 = vadd.f32 %v2175, %v2263
        %v2265 = vpop.f32.mrf.mxu0
        %v2266 = vadd.f32 %v2177, %v2265
        %2267 = vmatmul.bf16.gmra.mxu0 %v1147
        %v2268 = vpop.f32.mrf.mxu0
        %v2269 = vadd.f32 %v2180, %v2268
        %v2270 = vpop.f32.mrf.mxu0
        %v2271 = vadd.f32 %v2182, %v2270
        %2272 = vmatmul.bf16.gmra.mxu0 %v1156
        %v2273 = vpop.f32.mrf.mxu0
        %v2274 = vadd.f32 %v2185, %v2273
        %v2275 = vpop.f32.mrf.mxu0
        %v2276 = vadd.f32 %v2187, %v2275
        %2277 = vmatmul.bf16.gmra.mxu0 %v1165
        %v2278 = vpop.f32.mrf.mxu0
        %v2279 = vadd.f32 %v2190, %v2278
        %v2280 = vpop.f32.mrf.mxu0
        %v2281 = vadd.f32 %v2192, %v2280
        %2282 = vmatmul.bf16.gmra.mxu0 %v1174
        %v2283 = vpop.f32.mrf.mxu0
        %v2284 = vadd.f32 %v2195, %v2283
        %v2285 = vpop.f32.mrf.mxu0
        %v2286 = vadd.f32 %v2197, %v2285
        %2287 = vdwg.mxu0
        %2288 = vmatpush.bf16.msra.mxu0 %v1665
        %2289 = vmatpush.bf16.msra.mxu0 %v1664
        %2290 = vmatpush.bf16.msra.mxu0 %v1663
        %2291 = vmatpush.bf16.msra.mxu0 %v1662
        %2292 = vmatpush.bf16.msra.mxu0 %v1661
        %2293 = vmatpush.bf16.msra.mxu0 %v1660
        %2294 = vmatpush.bf16.msra.mxu0 %v1659
        %2295 = vmatpush.bf16.msra.mxu0 %v1658
        %2296 = vmatmul.bf16.gmra.mxu0 %v1040
        %v2297 = vpop.f32.mrf.mxu0
        %v2298 = vadd.f32 %v2209, %v2297
        %v2299 = vpop.f32.mrf.mxu0
        %v2300 = vadd.f32 %v2211, %v2299
        %2301 = vmatmul.bf16.gmra.mxu0 %v1049
        %v2302 = vpop.f32.mrf.mxu0
        %v2303 = vadd.f32 %v2214, %v2302
        %v2304 = vpop.f32.mrf.mxu0
        %v2305 = vadd.f32 %v2216, %v2304
        %2306 = vmatmul.bf16.gmra.mxu0 %v1058
        %v2307 = vpop.f32.mrf.mxu0
        %v2308 = vadd.f32 %v2219, %v2307
        %v2309 = vpop.f32.mrf.mxu0
        %v2310 = vadd.f32 %v2221, %v2309
        %2311 = vmatmul.bf16.gmra.mxu0 %v1067
        %v2312 = vpop.f32.mrf.mxu0
        %v2313 = vadd.f32 %v2224, %v2312
        %v2314 = vpop.f32.mrf.mxu0
        %v2315 = vadd.f32 %v2226, %v2314
        %2316 = vmatmul.bf16.gmra.mxu0 %v1076
        %v2317 = vpop.f32.mrf.mxu0
        %v2318 = vadd.f32 %v2229, %v2317
        %v2319 = vpop.f32.mrf.mxu0
        %v2320 = vadd.f32 %v2231, %v2319
        %2321 = vmatmul.bf16.gmra.mxu0 %v1085
        %v2322 = vpop.f32.mrf.mxu0
        %v2323 = vadd.f32 %v2234, %v2322
        %v2324 = vpop.f32.mrf.mxu0
        %v2325 = vadd.f32 %v2236, %v2324
        %2326 = vmatmul.bf16.gmra.mxu0 %v1094
        %v2327 = vpop.f32.mrf.mxu0
        %v2328 = vadd.f32 %v2239, %v2327
        %v2329 = vpop.f32.mrf.mxu0
        %v2330 = vadd.f32 %v2241, %v2329
        %2331 = vmatmul.bf16.gmra.mxu0 %v1103
        %v2332 = vpop.f32.mrf.mxu0
        %v2333 = vadd.f32 %v2244, %v2332
        %v2334 = vpop.f32.mrf.mxu0
        %v2335 = vadd.f32 %v2246, %v2334
        %2336 = vmatmul.bf16.gmra.mxu0 %v1112
        %v2337 = vpop.f32.mrf.mxu0
        %v2338 = vadd.f32 %v2249, %v2337
        %v2339 = vpop.f32.mrf.mxu0
        %v2340 = vadd.f32 %v2251, %v2339
        %2341 = vmatmul.bf16.gmra.mxu0 %v1121
        %v2342 = vpop.f32.mrf.mxu0
        %v2343 = vadd.f32 %v2254, %v2342
        %v2344 = vpop.f32.mrf.mxu0
        %v2345 = vadd.f32 %v2256, %v2344
        %2346 = vmatmul.bf16.gmra.mxu0 %v1130
        %v2347 = vpop.f32.mrf.mxu0
        %v2348 = vadd.f32 %v2259, %v2347
        %v2349 = vpop.f32.mrf.mxu0
        %v2350 = vadd.f32 %v2261, %v2349
        %2351 = vmatmul.bf16.gmra.mxu0 %v1139
        %v2352 = vpop.f32.mrf.mxu0
        %v2353 = vadd.f32 %v2264, %v2352
        %v2354 = vpop.f32.mrf.mxu0
        %v2355 = vadd.f32 %v2266, %v2354
        %2356 = vmatmul.bf16.gmra.mxu0 %v1148
        %v2357 = vpop.f32.mrf.mxu0
        %v2358 = vadd.f32 %v2269, %v2357
        %v2359 = vpop.f32.mrf.mxu0
        %v2360 = vadd.f32 %v2271, %v2359
        %2361 = vmatmul.bf16.gmra.mxu0 %v1157
        %v2362 = vpop.f32.mrf.mxu0
        %v2363 = vadd.f32 %v2274, %v2362
        %v2364 = vpop.f32.mrf.mxu0
        %v2365 = vadd.f32 %v2276, %v2364
        %2366 = vmatmul.bf16.gmra.mxu0 %v1166
        %v2367 = vpop.f32.mrf.mxu0
        %v2368 = vadd.f32 %v2279, %v2367
        %v2369 = vpop.f32.mrf.mxu0
        %v2370 = vadd.f32 %v2281, %v2369
        %2371 = vmatmul.bf16.gmra.mxu0 %v1175
        %v2372 = vpop.f32.mrf.mxu0
        %v2373 = vadd.f32 %v2284, %v2372
        %v2374 = vpop.f32.mrf.mxu0
        %v2375 = vadd.f32 %v2286, %v2374
        %2376 = vdwg.mxu0
        %2377 = vmatpush.bf16.msra.mxu0 %v1673
        %2378 = vmatpush.bf16.msra.mxu0 %v1672
        %2379 = vmatpush.bf16.msra.mxu0 %v1671
        %2380 = vmatpush.bf16.msra.mxu0 %v1670
        %2381 = vmatpush.bf16.msra.mxu0 %v1669
        %2382 = vmatpush.bf16.msra.mxu0 %v1668
        %2383 = vmatpush.bf16.msra.mxu0 %v1667
        %2384 = vmatpush.bf16.msra.mxu0 %v1666
        %2385 = vmatmul.bf16.gmra.mxu0 %v1041
        %v2386 = vpop.f32.mrf.mxu0
        %v2387 = vadd.f32 %v2298, %v2386
        %v2388 = vpop.f32.mrf.mxu0
        %v2389 = vadd.f32 %v2300, %v2388
        %2390 = vmatmul.bf16.gmra.mxu0 %v1050
        %v2391 = vpop.f32.mrf.mxu0
        %v2392 = vadd.f32 %v2303, %v2391
        %v2393 = vpop.f32.mrf.mxu0
        %v2394 = vadd.f32 %v2305, %v2393
        %2395 = vmatmul.bf16.gmra.mxu0 %v1059
        %v2396 = vpop.f32.mrf.mxu0
        %v2397 = vadd.f32 %v2308, %v2396
        %v2398 = vpop.f32.mrf.mxu0
        %v2399 = vadd.f32 %v2310, %v2398
        %2400 = vmatmul.bf16.gmra.mxu0 %v1068
        %v2401 = vpop.f32.mrf.mxu0
        %v2402 = vadd.f32 %v2313, %v2401
        %v2403 = vpop.f32.mrf.mxu0
        %v2404 = vadd.f32 %v2315, %v2403
        %2405 = vmatmul.bf16.gmra.mxu0 %v1077
        %v2406 = vpop.f32.mrf.mxu0
        %v2407 = vadd.f32 %v2318, %v2406
        %v2408 = vpop.f32.mrf.mxu0
        %v2409 = vadd.f32 %v2320, %v2408
        %2410 = vmatmul.bf16.gmra.mxu0 %v1086
        %v2411 = vpop.f32.mrf.mxu0
        %v2412 = vadd.f32 %v2323, %v2411
        %v2413 = vpop.f32.mrf.mxu0
        %v2414 = vadd.f32 %v2325, %v2413
        %2415 = vmatmul.bf16.gmra.mxu0 %v1095
        %v2416 = vpop.f32.mrf.mxu0
        %v2417 = vadd.f32 %v2328, %v2416
        %v2418 = vpop.f32.mrf.mxu0
        %v2419 = vadd.f32 %v2330, %v2418
        %2420 = vmatmul.bf16.gmra.mxu0 %v1104
        %v2421 = vpop.f32.mrf.mxu0
        %v2422 = vadd.f32 %v2333, %v2421
        %v2423 = vpop.f32.mrf.mxu0
        %v2424 = vadd.f32 %v2335, %v2423
        %2425 = vmatmul.bf16.gmra.mxu0 %v1113
        %v2426 = vpop.f32.mrf.mxu0
        %v2427 = vadd.f32 %v2338, %v2426
        %v2428 = vpop.f32.mrf.mxu0
        %v2429 = vadd.f32 %v2340, %v2428
        %2430 = vmatmul.bf16.gmra.mxu0 %v1122
        %v2431 = vpop.f32.mrf.mxu0
        %v2432 = vadd.f32 %v2343, %v2431
        %v2433 = vpop.f32.mrf.mxu0
        %v2434 = vadd.f32 %v2345, %v2433
        %2435 = vmatmul.bf16.gmra.mxu0 %v1131
        %v2436 = vpop.f32.mrf.mxu0
        %v2437 = vadd.f32 %v2348, %v2436
        %v2438 = vpop.f32.mrf.mxu0
        %v2439 = vadd.f32 %v2350, %v2438
        %2440 = vmatmul.bf16.gmra.mxu0 %v1140
        %v2441 = vpop.f32.mrf.mxu0
        %v2442 = vadd.f32 %v2353, %v2441
        %v2443 = vpop.f32.mrf.mxu0
        %v2444 = vadd.f32 %v2355, %v2443
        %2445 = vmatmul.bf16.gmra.mxu0 %v1149
        %v2446 = vpop.f32.mrf.mxu0
        %v2447 = vadd.f32 %v2358, %v2446
        %v2448 = vpop.f32.mrf.mxu0
        %v2449 = vadd.f32 %v2360, %v2448
        %2450 = vmatmul.bf16.gmra.mxu0 %v1158
        %v2451 = vpop.f32.mrf.mxu0
        %v2452 = vadd.f32 %v2363, %v2451
        %v2453 = vpop.f32.mrf.mxu0
        %v2454 = vadd.f32 %v2365, %v2453
        %2455 = vmatmul.bf16.gmra.mxu0 %v1167
        %v2456 = vpop.f32.mrf.mxu0
        %v2457 = vadd.f32 %v2368, %v2456
        %v2458 = vpop.f32.mrf.mxu0
        %v2459 = vadd.f32 %v2370, %v2458
        %2460 = vmatmul.bf16.gmra.mxu0 %v1176
        %v2461 = vpop.f32.mrf.mxu0
        %v2462 = vadd.f32 %v2373, %v2461
        %v2463 = vpop.f32.mrf.mxu0
        %v2464 = vadd.f32 %v2375, %v2463
        %2465 = vdwg.mxu0
        %2466 = vmatpush.bf16.msra.mxu0 %v1681
        %2467 = vmatpush.bf16.msra.mxu0 %v1680
        %2468 = vmatpush.bf16.msra.mxu0 %v1679
        %2469 = vmatpush.bf16.msra.mxu0 %v1678
        %2470 = vmatpush.bf16.msra.mxu0 %v1677
        %2471 = vmatpush.bf16.msra.mxu0 %v1676
        %2472 = vmatpush.bf16.msra.mxu0 %v1675
        %2473 = vmatpush.bf16.msra.mxu0 %v1674
        %2474 = vmatmul.bf16.gmra.mxu0 %v1042
        %v2475 = vpop.f32.mrf.mxu0
        %v2476 = vadd.f32 %v2387, %v2475
        %v2477 = vpop.f32.mrf.mxu0
        %v2478 = vadd.f32 %v2389, %v2477
        %2479 = vmatmul.bf16.gmra.mxu0 %v1051
        %v2480 = vpop.f32.mrf.mxu0
        %v2481 = vadd.f32 %v2392, %v2480
        %v2482 = vpop.f32.mrf.mxu0
        %v2483 = vadd.f32 %v2394, %v2482
        %2484 = vmatmul.bf16.gmra.mxu0 %v1060
        %v2485 = vpop.f32.mrf.mxu0
        %v2486 = vadd.f32 %v2397, %v2485
        %v2487 = vpop.f32.mrf.mxu0
        %v2488 = vadd.f32 %v2399, %v2487
        %2489 = vmatmul.bf16.gmra.mxu0 %v1069
        %v2490 = vpop.f32.mrf.mxu0
        %v2491 = vadd.f32 %v2402, %v2490
        %v2492 = vpop.f32.mrf.mxu0
        %v2493 = vadd.f32 %v2404, %v2492
        %2494 = vmatmul.bf16.gmra.mxu0 %v1078
        %v2495 = vpop.f32.mrf.mxu0
        %v2496 = vadd.f32 %v2407, %v2495
        %v2497 = vpop.f32.mrf.mxu0
        %v2498 = vadd.f32 %v2409, %v2497
        %2499 = vmatmul.bf16.gmra.mxu0 %v1087
        %v2500 = vpop.f32.mrf.mxu0
        %v2501 = vadd.f32 %v2412, %v2500
        %v2502 = vpop.f32.mrf.mxu0
        %v2503 = vadd.f32 %v2414, %v2502
        %2504 = vmatmul.bf16.gmra.mxu0 %v1096
        %v2505 = vpop.f32.mrf.mxu0
        %v2506 = vadd.f32 %v2417, %v2505
        %v2507 = vpop.f32.mrf.mxu0
        %v2508 = vadd.f32 %v2419, %v2507
        %2509 = vmatmul.bf16.gmra.mxu0 %v1105
        %v2510 = vpop.f32.mrf.mxu0
        %v2511 = vadd.f32 %v2422, %v2510
        %v2512 = vpop.f32.mrf.mxu0
        %v2513 = vadd.f32 %v2424, %v2512
        %2514 = vmatmul.bf16.gmra.mxu0 %v1114
        %v2515 = vpop.f32.mrf.mxu0
        %v2516 = vadd.f32 %v2427, %v2515
        %v2517 = vpop.f32.mrf.mxu0
        %v2518 = vadd.f32 %v2429, %v2517
        %2519 = vmatmul.bf16.gmra.mxu0 %v1123
        %v2520 = vpop.f32.mrf.mxu0
        %v2521 = vadd.f32 %v2432, %v2520
        %v2522 = vpop.f32.mrf.mxu0
        %v2523 = vadd.f32 %v2434, %v2522
        %2524 = vmatmul.bf16.gmra.mxu0 %v1132
        %v2525 = vpop.f32.mrf.mxu0
        %v2526 = vadd.f32 %v2437, %v2525
        %v2527 = vpop.f32.mrf.mxu0
        %v2528 = vadd.f32 %v2439, %v2527
        %2529 = vmatmul.bf16.gmra.mxu0 %v1141
        %v2530 = vpop.f32.mrf.mxu0
        %v2531 = vadd.f32 %v2442, %v2530
        %v2532 = vpop.f32.mrf.mxu0
        %v2533 = vadd.f32 %v2444, %v2532
        %2534 = vmatmul.bf16.gmra.mxu0 %v1150
        %v2535 = vpop.f32.mrf.mxu0
        %v2536 = vadd.f32 %v2447, %v2535
        %v2537 = vpop.f32.mrf.mxu0
        %v2538 = vadd.f32 %v2449, %v2537
        %2539 = vmatmul.bf16.gmra.mxu0 %v1159
        %v2540 = vpop.f32.mrf.mxu0
        %v2541 = vadd.f32 %v2452, %v2540
        %v2542 = vpop.f32.mrf.mxu0
        %v2543 = vadd.f32 %v2454, %v2542
        %2544 = vmatmul.bf16.gmra.mxu0 %v1168
        %v2545 = vpop.f32.mrf.mxu0
        %v2546 = vadd.f32 %v2457, %v2545
        %v2547 = vpop.f32.mrf.mxu0
        %v2548 = vadd.f32 %v2459, %v2547
        %2549 = vmatmul.bf16.gmra.mxu0 %v1177
        %v2550 = vpop.f32.mrf.mxu0
        %v2551 = vadd.f32 %v2462, %v2550
        %v2552 = vpop.f32.mrf.mxu0
        %v2553 = vadd.f32 %v2464, %v2552
        %2554 = vdwg.mxu0
        %v2555 = vmax.f32 %v2476, 0.0
        %v2556 = vmax.f32 %v2478, 0.0
        %v2557 = vmax.f32 %v2481, 0.0
        %v2558 = vmax.f32 %v2483, 0.0
        %v2559 = vmax.f32 %v2486, 0.0
        %v2560 = vmax.f32 %v2488, 0.0
        %v2561 = vmax.f32 %v2491, 0.0
        %v2562 = vmax.f32 %v2493, 0.0
        %v2563 = vmax.f32 %v2496, 0.0
        %v2564 = vmax.f32 %v2498, 0.0
        %v2565 = vmax.f32 %v2501, 0.0
        %v2566 = vmax.f32 %v2503, 0.0
        %v2567 = vmax.f32 %v2506, 0.0
        %v2568 = vmax.f32 %v2508, 0.0
        %v2569 = vmax.f32 %v2511, 0.0
        %v2570 = vmax.f32 %v2513, 0.0
        %v2571 = vmax.f32 %v2516, 0.0
        %v2572 = vmax.f32 %v2518, 0.0
        %v2573 = vmax.f32 %v2521, 0.0
        %v2574 = vmax.f32 %v2523, 0.0
        %v2575 = vmax.f32 %v2526, 0.0
        %v2576 = vmax.f32 %v2528, 0.0
        %v2577 = vmax.f32 %v2531, 0.0
        %v2578 = vmax.f32 %v2533, 0.0
        %v2579 = vmax.f32 %v2536, 0.0
        %v2580 = vmax.f32 %v2538, 0.0
        %v2581 = vmax.f32 %v2541, 0.0
        %v2582 = vmax.f32 %v2543, 0.0
        %v2583 = vmax.f32 %v2546, 0.0
        %v2584 = vmax.f32 %v2548, 0.0
        %v2585 = vmax.f32 %v2551, 0.0
        %v2586 = vmax.f32 %v2553, 0.0
        %v2587 = vpack.c.bf16 %v2556, %v2555
        %v2588 = vpack.c.bf16 %v2558, %v2557
        %v2589 = vpack.c.bf16 %v2560, %v2559
        %v2590 = vpack.c.bf16 %v2562, %v2561
        %v2591 = vpack.c.bf16 %v2564, %v2563
        %v2592 = vpack.c.bf16 %v2566, %v2565
        %v2593 = vpack.c.bf16 %v2568, %v2567
        %v2594 = vpack.c.bf16 %v2570, %v2569
        %v2595 = vpack.c.bf16 %v2572, %v2571
        %v2596 = vpack.c.bf16 %v2574, %v2573
        %v2597 = vpack.c.bf16 %v2576, %v2575
        %v2598 = vpack.c.bf16 %v2578, %v2577
        %v2599 = vpack.c.bf16 %v2580, %v2579
        %v2600 = vpack.c.bf16 %v2582, %v2581
        %v2601 = vpack.c.bf16 %v2584, %v2583
        %v2602 = vpack.c.bf16 %v2586, %v2585
        %v2603 = vld [vmem:[%s4] sm:$0xf]
        %v2604 = vld [vmem:[%s4 + $0x4] sm:$0xf]
        %v2605 = vld [vmem:[%s4 + $0x8] sm:$0xf]
        %v2606 = vld [vmem:[%s4 + $0xc] sm:$0xf]
        %v2607 = vld [vmem:[%s4 + $0x10] sm:$0xf]
        %v2608 = vld [vmem:[%s4 + $0x14] sm:$0xf]
        %v2609 = vld [vmem:[%s4 + $0x18] sm:$0xf]
        %v2610 = vld [vmem:[%s4 + $0x1c] sm:$0xf]
        %v2611 = vld [vmem:[%s4 + $0x20] sm:$0xf]
        %v2612 = vld [vmem:[%s4 + $0x24] sm:$0xf]
        %v2613 = vld [vmem:[%s4 + $0x28] sm:$0xf]
        %v2614 = vld [vmem:[%s4 + $0x2c] sm:$0xf]
        %v2615 = vld [vmem:[%s4 + $0x30] sm:$0xf]
        %v2616 = vld [vmem:[%s4 + $0x34] sm:$0xf]
        %v2617 = vld [vmem:[%s4 + $0x38] sm:$0xf]
        %v2618 = vld [vmem:[%s4 + $0x3c] sm:$0xf]
        %v2619 = vld [vmem:[%s5] sm:$0x1]
        %v2621 = vperm.slane %v2619, 0
        %v2639 = vunpack.c.l.b16 %v2603
        %v2640 = vunpack.c.l.b16 %v2604
        %v2641 = vunpack.c.l.b16 %v2605
        %v2642 = vunpack.c.l.b16 %v2606
        %v2643 = vunpack.c.l.b16 %v2607
        %v2644 = vunpack.c.l.b16 %v2608
        %v2645 = vunpack.c.l.b16 %v2609
        %v2646 = vunpack.c.l.b16 %v2610
        %v2647 = vunpack.c.l.b16 %v2611
        %v2648 = vunpack.c.l.b16 %v2612
        %v2649 = vunpack.c.l.b16 %v2613
        %v2650 = vunpack.c.l.b16 %v2614
        %v2651 = vunpack.c.l.b16 %v2615
        %v2652 = vunpack.c.l.b16 %v2616
        %v2653 = vunpack.c.l.b16 %v2617
        %v2654 = vunpack.c.l.b16 %v2618
        %v2655 = vpack.c.b16 %v2640, %v2639
        %v2656 = vpack.c.b16 %v2642, %v2641
        %v2657 = vpack.c.b16 %v2644, %v2643
        %v2658 = vpack.c.b16 %v2646, %v2645
        %v2659 = vpack.c.b16 %v2648, %v2647
        %v2660 = vpack.c.b16 %v2650, %v2649
        %v2661 = vpack.c.b16 %v2652, %v2651
        %v2662 = vpack.c.b16 %v2654, %v2653
        %2671 = vmatpush.bf16.msra.mxu0 %v2662
        %2672 = vmatpush.bf16.msra.mxu0 %v2661
        %2673 = vmatpush.bf16.msra.mxu0 %v2660
        %2674 = vmatpush.bf16.msra.mxu0 %v2659
        %2675 = vmatpush.bf16.msra.mxu0 %v2658
        %2676 = vmatpush.bf16.msra.mxu0 %v2657
        %2677 = vmatpush.bf16.msra.mxu0 %v2656
        %2678 = vmatpush.bf16.msra.mxu0 %v2655
        %2679 = vmatmul.bf16.gmra.mxu0 %v2587
        %v2680 = vpop.f32.mrf.mxu0
        %v2681 = vadd.f32 %v2621, %v2680
        %v2682 = vpop.f32.mrf.mxu0
        %v2683 = vadd.f32 %v2621, %v2682
        %2684 = vmatmul.bf16.gmra.mxu0 %v2588
        %v2685 = vpop.f32.mrf.mxu0
        %v2686 = vadd.f32 %v2621, %v2685
        %v2687 = vpop.f32.mrf.mxu0
        %v2688 = vadd.f32 %v2621, %v2687
        %2689 = vmatmul.bf16.gmra.mxu0 %v2589
        %v2690 = vpop.f32.mrf.mxu0
        %v2691 = vadd.f32 %v2621, %v2690
        %v2692 = vpop.f32.mrf.mxu0
        %v2693 = vadd.f32 %v2621, %v2692
        %2694 = vmatmul.bf16.gmra.mxu0 %v2590
        %v2695 = vpop.f32.mrf.mxu0
        %v2696 = vadd.f32 %v2621, %v2695
        %v2697 = vpop.f32.mrf.mxu0
        %v2698 = vadd.f32 %v2621, %v2697
        %2699 = vmatmul.bf16.gmra.mxu0 %v2591
        %v2700 = vpop.f32.mrf.mxu0
        %v2701 = vadd.f32 %v2621, %v2700
        %v2702 = vpop.f32.mrf.mxu0
        %v2703 = vadd.f32 %v2621, %v2702
        %2704 = vmatmul.bf16.gmra.mxu0 %v2592
        %v2705 = vpop.f32.mrf.mxu0
        %v2706 = vadd.f32 %v2621, %v2705
        %v2707 = vpop.f32.mrf.mxu0
        %v2708 = vadd.f32 %v2621, %v2707
        %2709 = vmatmul.bf16.gmra.mxu0 %v2593
        %v2710 = vpop.f32.mrf.mxu0
        %v2711 = vadd.f32 %v2621, %v2710
        %v2712 = vpop.f32.mrf.mxu0
        %v2713 = vadd.f32 %v2621, %v2712
        %2714 = vmatmul.bf16.gmra.mxu0 %v2594
        %v2715 = vpop.f32.mrf.mxu0
        %v2716 = vadd.f32 %v2621, %v2715
        %v2717 = vpop.f32.mrf.mxu0
        %v2718 = vadd.f32 %v2621, %v2717
        %2719 = vmatmul.bf16.gmra.mxu0 %v2595
        %v2720 = vpop.f32.mrf.mxu0
        %v2721 = vadd.f32 %v2621, %v2720
        %v2722 = vpop.f32.mrf.mxu0
        %v2723 = vadd.f32 %v2621, %v2722
        %2724 = vmatmul.bf16.gmra.mxu0 %v2596
        %v2725 = vpop.f32.mrf.mxu0
        %v2726 = vadd.f32 %v2621, %v2725
        %v2727 = vpop.f32.mrf.mxu0
        %v2728 = vadd.f32 %v2621, %v2727
        %2729 = vmatmul.bf16.gmra.mxu0 %v2597
        %v2730 = vpop.f32.mrf.mxu0
        %v2731 = vadd.f32 %v2621, %v2730
        %v2732 = vpop.f32.mrf.mxu0
        %v2733 = vadd.f32 %v2621, %v2732
        %2734 = vmatmul.bf16.gmra.mxu0 %v2598
        %v2735 = vpop.f32.mrf.mxu0
        %v2736 = vadd.f32 %v2621, %v2735
        %v2737 = vpop.f32.mrf.mxu0
        %v2738 = vadd.f32 %v2621, %v2737
        %2739 = vmatmul.bf16.gmra.mxu0 %v2599
        %v2740 = vpop.f32.mrf.mxu0
        %v2741 = vadd.f32 %v2621, %v2740
        %v2742 = vpop.f32.mrf.mxu0
        %v2743 = vadd.f32 %v2621, %v2742
        %2744 = vmatmul.bf16.gmra.mxu0 %v2600
        %v2745 = vpop.f32.mrf.mxu0
        %v2746 = vadd.f32 %v2621, %v2745
        %v2747 = vpop.f32.mrf.mxu0
        %v2748 = vadd.f32 %v2621, %v2747
        %2749 = vmatmul.bf16.gmra.mxu0 %v2601
        %v2750 = vpop.f32.mrf.mxu0
        %v2751 = vadd.f32 %v2621, %v2750
        %v2752 = vpop.f32.mrf.mxu0
        %v2753 = vadd.f32 %v2621, %v2752
        %2754 = vmatmul.bf16.gmra.mxu0 %v2602
        %v2755 = vpop.f32.mrf.mxu0
        %v2756 = vadd.f32 %v2621, %v2755
        %v2757 = vpop.f32.mrf.mxu0
        %v2758 = vadd.f32 %v2621, %v2757
        %2759 = vdwg.mxu0
        %v2760 = vld [vmem:[%s275] sm:$0xff]
        %v2761 = vld [vmem:[%s275 + $0x8] sm:$0xff]
        %v2762 = vld [vmem:[%s275 + $0x10] sm:$0xff]
        %v2763 = vld [vmem:[%s275 + $0x18] sm:$0xff]
        %v2764 = vld [vmem:[%s275 + $0x20] sm:$0xff]
        %v2765 = vld [vmem:[%s275 + $0x28] sm:$0xff]
        %v2766 = vld [vmem:[%s275 + $0x30] sm:$0xff]
        %v2767 = vld [vmem:[%s275 + $0x38] sm:$0xff]
        %v2768 = vld [vmem:[%s275 + $0x40] sm:$0xff]
        %v2769 = vld [vmem:[%s275 + $0x48] sm:$0xff]
        %v2770 = vld [vmem:[%s275 + $0x50] sm:$0xff]
        %v2771 = vld [vmem:[%s275 + $0x58] sm:$0xff]
        %v2772 = vld [vmem:[%s275 + $0x60] sm:$0xff]
        %v2773 = vld [vmem:[%s275 + $0x68] sm:$0xff]
        %v2774 = vld [vmem:[%s275 + $0x70] sm:$0xff]
        %v2775 = vld [vmem:[%s275 + $0x78] sm:$0xff]
        %v2776 = vld [vmem:[%s275 + $0x80] sm:$0xff]
        %v2777 = vld [vmem:[%s275 + $0x88] sm:$0xff]
        %v2778 = vld [vmem:[%s275 + $0x90] sm:$0xff]
        %v2779 = vld [vmem:[%s275 + $0x98] sm:$0xff]
        %v2780 = vld [vmem:[%s275 + $0xa0] sm:$0xff]
        %v2781 = vld [vmem:[%s275 + $0xa8] sm:$0xff]
        %v2782 = vld [vmem:[%s275 + $0xb0] sm:$0xff]
        %v2783 = vld [vmem:[%s275 + $0xb8] sm:$0xff]
        %v2784 = vld [vmem:[%s275 + $0xc0] sm:$0xff]
        %v2785 = vld [vmem:[%s275 + $0xc8] sm:$0xff]
        %v2786 = vld [vmem:[%s275 + $0xd0] sm:$0xff]
        %v2787 = vld [vmem:[%s275 + $0xd8] sm:$0xff]
        %v2788 = vld [vmem:[%s275 + $0xe0] sm:$0xff]
        %v2789 = vld [vmem:[%s275 + $0xe8] sm:$0xff]
        %v2790 = vld [vmem:[%s275 + $0xf0] sm:$0xff]
        %v2791 = vld [vmem:[%s275 + $0xf8] sm:$0xff]
        %v2792 = vadd.f32 %v2681, %v2760
        %v2793 = vadd.f32 %v2683, %v2761
        %v2794 = vadd.f32 %v2686, %v2762
        %v2795 = vadd.f32 %v2688, %v2763
        %v2796 = vadd.f32 %v2691, %v2764
        %v2797 = vadd.f32 %v2693, %v2765
        %v2798 = vadd.f32 %v2696, %v2766
        %v2799 = vadd.f32 %v2698, %v2767
        %v2800 = vadd.f32 %v2701, %v2768
        %v2801 = vadd.f32 %v2703, %v2769
        %v2802 = vadd.f32 %v2706, %v2770
        %v2803 = vadd.f32 %v2708, %v2771
        %v2804 = vadd.f32 %v2711, %v2772
        %v2805 = vadd.f32 %v2713, %v2773
        %v2806 = vadd.f32 %v2716, %v2774
        %v2807 = vadd.f32 %v2718, %v2775
        %v2808 = vadd.f32 %v2721, %v2776
        %v2809 = vadd.f32 %v2723, %v2777
        %v2810 = vadd.f32 %v2726, %v2778
        %v2811 = vadd.f32 %v2728, %v2779
        %v2812 = vadd.f32 %v2731, %v2780
        %v2813 = vadd.f32 %v2733, %v2781
        %v2814 = vadd.f32 %v2736, %v2782
        %v2815 = vadd.f32 %v2738, %v2783
        %v2816 = vadd.f32 %v2741, %v2784
        %v2817 = vadd.f32 %v2743, %v2785
        %v2818 = vadd.f32 %v2746, %v2786
        %v2819 = vadd.f32 %v2748, %v2787
        %v2820 = vadd.f32 %v2751, %v2788
        %v2821 = vadd.f32 %v2753, %v2789
        %v2822 = vadd.f32 %v2756, %v2790
        %v2823 = vadd.f32 %v2758, %v2791
        %v2824 = vmax.f32 %v2792, 0.0
        %v2825 = vmax.f32 %v2793, 0.0
        %v2826 = vmax.f32 %v2794, 0.0
        %v2827 = vmax.f32 %v2795, 0.0
        %v2828 = vmax.f32 %v2796, 0.0
        %v2829 = vmax.f32 %v2797, 0.0
        %v2830 = vmax.f32 %v2798, 0.0
        %v2831 = vmax.f32 %v2799, 0.0
        %v2832 = vmax.f32 %v2800, 0.0
        %v2833 = vmax.f32 %v2801, 0.0
        %v2834 = vmax.f32 %v2802, 0.0
        %v2835 = vmax.f32 %v2803, 0.0
        %v2836 = vmax.f32 %v2804, 0.0
        %v2837 = vmax.f32 %v2805, 0.0
        %v2838 = vmax.f32 %v2806, 0.0
        %v2839 = vmax.f32 %v2807, 0.0
        %v2840 = vmax.f32 %v2808, 0.0
        %v2841 = vmax.f32 %v2809, 0.0
        %v2842 = vmax.f32 %v2810, 0.0
        %v2843 = vmax.f32 %v2811, 0.0
        %v2844 = vmax.f32 %v2812, 0.0
        %v2845 = vmax.f32 %v2813, 0.0
        %v2846 = vmax.f32 %v2814, 0.0
        %v2847 = vmax.f32 %v2815, 0.0
        %v2848 = vmax.f32 %v2816, 0.0
        %v2849 = vmax.f32 %v2817, 0.0
        %v2850 = vmax.f32 %v2818, 0.0
        %v2851 = vmax.f32 %v2819, 0.0
        %v2852 = vmax.f32 %v2820, 0.0
        %v2853 = vmax.f32 %v2821, 0.0
        %v2854 = vmax.f32 %v2822, 0.0
        %v2855 = vmax.f32 %v2823, 0.0
        %2856 = vst [vmem:[%s263] sm:$0xff] %v2824
        %2857 = vst [vmem:[%s263 + $0x8] sm:$0xff] %v2825
        %2858 = vst [vmem:[%s263 + $0x10] sm:$0xff] %v2826
        %2859 = vst [vmem:[%s263 + $0x18] sm:$0xff] %v2827
        %2860 = vst [vmem:[%s263 + $0x20] sm:$0xff] %v2828
        %2861 = vst [vmem:[%s263 + $0x28] sm:$0xff] %v2829
        %2862 = vst [vmem:[%s263 + $0x30] sm:$0xff] %v2830
        %2863 = vst [vmem:[%s263 + $0x38] sm:$0xff] %v2831
        %2864 = vst [vmem:[%s263 + $0x40] sm:$0xff] %v2832
        %2865 = vst [vmem:[%s263 + $0x48] sm:$0xff] %v2833
        %2866 = vst [vmem:[%s263 + $0x50] sm:$0xff] %v2834
        %2867 = vst [vmem:[%s263 + $0x58] sm:$0xff] %v2835
        %2868 = vst [vmem:[%s263 + $0x60] sm:$0xff] %v2836
        %2869 = vst [vmem:[%s263 + $0x68] sm:$0xff] %v2837
        %2870 = vst [vmem:[%s263 + $0x70] sm:$0xff] %v2838
        %2871 = vst [vmem:[%s263 + $0x78] sm:$0xff] %v2839
        %2872 = vst [vmem:[%s263 + $0x80] sm:$0xff] %v2840
        %2873 = vst [vmem:[%s263 + $0x88] sm:$0xff] %v2841
        %2874 = vst [vmem:[%s263 + $0x90] sm:$0xff] %v2842
        %2875 = vst [vmem:[%s263 + $0x98] sm:$0xff] %v2843
        %2876 = vst [vmem:[%s263 + $0xa0] sm:$0xff] %v2844
        %2877 = vst [vmem:[%s263 + $0xa8] sm:$0xff] %v2845
        %2878 = vst [vmem:[%s263 + $0xb0] sm:$0xff] %v2846
        %2879 = vst [vmem:[%s263 + $0xb8] sm:$0xff] %v2847
        %2880 = vst [vmem:[%s263 + $0xc0] sm:$0xff] %v2848
        %2881 = vst [vmem:[%s263 + $0xc8] sm:$0xff] %v2849
        %2882 = vst [vmem:[%s263 + $0xd0] sm:$0xff] %v2850
        %2883 = vst [vmem:[%s263 + $0xd8] sm:$0xff] %v2851
        %2884 = vst [vmem:[%s263 + $0xe0] sm:$0xff] %v2852
        %2885 = vst [vmem:[%s263 + $0xe8] sm:$0xff] %v2853
        %2886 = vst [vmem:[%s263 + $0xf0] sm:$0xff] %v2854
        %2887 = vst [vmem:[%s263 + $0xf8] sm:$0xff] %v2855
        %s2888 = sand.u32 %s164, 1
        %s2889 = scalar_lea.sflag [#allocation3], %s2888
        %s2890 = sand.u32 %s164, 1
        %s2891 = smul.addr %s2890, 256
        %s2892 = scalar_lea.vmem [#allocation2], %s2891
        // Predicated region
        $region45: #{basic_block_pallas.1} parent=43 // pred_check
          %p2893 = pneg %p174
        $region46: #{basic_block_pallas.1} parent=43 // pred_check_branch
          %2895 = sbr.rel (%p2893) target = $region48
        $region47: #{basic_block_pallas.1} parent=43 // pred_region
          %s2896 = smul.u32 32, %s20
          %2898 = vsyncadd %s2889, 0
          %s2899 = smul.addr %s2896, 8
          %s2900 = scalar_lea.hbm %s6, %s2899
          %s2901 = sshll.u32 %s2892, 4
          %s2902 = int_to_ptr.vmem [resolvable:$true] %s2901
          %s2903 = sshll.u32 %s2900, 4
          %s2904 = int_to_ptr.hbm [resolvable:$true] %s2903
          %2909 = dma.vmem_to_hbm [thread:$0]  %s2902, 4096, %s2904, %s2889, 128, 128, 8
        $region48: #{basic_block_pallas.1} parent=43 // pred_fallthru
          _
      $region44: #{basic_block_pallas.1} parent=5 // pred_fallthru
        _
      %p2910 = scmp.le.s32.totalorder 2, %s15
      // Predicated region
      $region49: #{basic_block_pallas.1} parent=5 // pred_check
        %p2911 = pneg %p2910
      $region50: #{basic_block_pallas.1} parent=5 // pred_check_branch
        %2913 = sbr.rel (%p2911) target = $region52
      $region51: #{basic_block_pallas.1} parent=5 // pred_region
        %s2914 = ssub.s32 %s15, 2
        // Predicated region
        $region53: #{basic_block_pallas.1} parent=51 // pred_check
          %p2915 = pneg %p180
        $region54: #{basic_block_pallas.1} parent=51 // pred_check_branch
          %2917 = sbr.rel (%p2915) target = $region56
        $region55: #{basic_block_pallas.1} parent=51 // pred_region
          %s2918 = sand.u32 %s165, 1
          %s2919 = scalar_lea.sflag [#allocation3], %s2918
          %s2920 = sand.u32 %s165, 1
          %s2921 = smul.addr %s2920, 256
          %s2922 = scalar_lea.vmem [#allocation2], %s2921
          %2924 = dma.done %s2919, 4096
        $region56: #{basic_block_pallas.1} parent=51 // pred_fallthru
          _
      $region52: #{basic_block_pallas.1} parent=5 // pred_fallthru
        _
    $region6: #{basic_block_pallas.1} parent=1 // loop_footer
      %s19 = sadd.s32 1, %s15
    $region7: #{basic_block_pallas.1} parent=1 // loop_footer_branch
      %14 = sbr.rel target = $region3
    $region8: #{basic_block_pallas.1} parent=1 // loop_exit
      _
    %2925 = vsyncpa [#allocation3], 1
    %s2926 = scalar_lea.sflag [#allocation3], 1
    %2927 = vsyncpa %s2926, 1

</llo_original>
